<compile_context>
chip_gen: v7x
topology: tpu7x:2x2x1
jax: 0.10.0
libtpu: 0.0.40
codegen_flags: <defaults>
</compile_context>

<pallas_src>
import jax
import jax.numpy as jnp
import numpy as np
from jax.experimental import pallas as pl
from jax.experimental.pallas import tpu as pltpu

LN_EPS = 1e-5
LANE = 128

# ----------------------------------------------------------------------------------
# Exact-ish erf GELU (Abramowitz & Stegun 7.1.26, |err| <= 1.5e-7) — only exp/mul/add,
# so it always lowers in Mosaic and the transcendental lands on the EUP slot.
# ----------------------------------------------------------------------------------
_ERF_P = 0.3275911
_ERF_A1 = 0.254829592
_ERF_A2 = -0.284496736
_ERF_A3 = 1.421413741
_ERF_A4 = -1.453152027
_ERF_A5 = 1.061405429


def _erf(x):
    ax = jnp.abs(x)
    t = 1.0 / (1.0 + _ERF_P * ax)
    poly = ((((_ERF_A5 * t + _ERF_A4) * t + _ERF_A3) * t + _ERF_A2) * t + _ERF_A1) * t
    e = 1.0 - poly * jnp.exp(-ax * ax)
    return jnp.where(x < 0.0, -e, e)


def _gelu(x, approximate):
    if approximate:
        return jax.nn.gelu(x, approximate=True)        # tanh GELU -> EUP, if parity permits
    return 0.5 * x * (1.0 + _erf(x * 0.7071067811865476))


# ----------------------------------------------------------------------------------
# Kernel: all experts' FFNs + gate-weighted mixture for one token tile
# ----------------------------------------------------------------------------------
def _make_moe_kernel(ef, e_pad, approximate_gelu):
    def kernel(x_ref, g_ref, w1_ref, b1_ref, pool_ref, scale_rhs_ref, off_rhs_ref,
               w2_ref, out_ref, lhs_ref):
        # Shapes per token tile of tm rows (EF = E*F, E_pad = 8, O_pad = 128):
        #   x:(tm,D) bf16   g:(tm,E_pad) f32
        #   w1:(D,EF) bf16  b1:(1,EF) f32
        #   pool:(EF,E_pad) f32 (block-diag 1/F)
        #   scale_rhs:(E_pad,EF) f32 (= seg * ln_g)
        #   off_rhs:(2*E_pad, EF+O_pad) f32 (= [[seg*ln_b | b2],[seg*ln_g | 0]])
        #   w2:(EF,O_pad) bf16   out:(tm,O_pad) f32   lhs (scratch):(tm,2*E_pad) f32
        f32 = jnp.float32

        # fc1 for ALL experts in one wide, lane-packed MXU matmul (bf16 in, f32 acc).
        h = jnp.dot(x_ref[...], w1_ref[...], preferred_element_type=f32) + b1_ref[...]
        h = _gelu(h, approximate_gelu)

        # Per-expert LayerNorm stats via pooling matmuls (lane-dense, no (tm,E,F) relayouts).
        pool = pool_ref[...]
        mu_e = jnp.dot(h, pool, preferred_element_type=f32)          # (tm, E_pad)
        ms_e = jnp.dot(h * h, pool, preferred_element_type=f32)      # (tm, E_pad)
        var_e = jnp.maximum(ms_e - mu_e * mu_e, 0.0)                 # biased variance

        g = g_ref[...]                                               # gates (padded experts = 0)
        a_e = g * jax.lax.rsqrt(var_e + LN_EPS)                      # gate_e / std_e

        # gate_e * LN_e(h_e) = h * scale + offset  (ln_g/ln_b folded into the RHS matrices).
        scale = jnp.dot(a_e, scale_rhs_ref[...], preferred_element_type=f32)     # (tm, EF)

        # One combined matmul for the LN offset AND the gate-weighted fc2 bias.
        lhs_ref[:, :e_pad] = g
        lhs_ref[:, e_pad:] = -(a_e * mu_e)
        off_bias = jnp.dot(lhs_ref[...], off_rhs_ref[...],
                           preferred_element_type=f32)               # (tm, EF + O_pad)
        offset = off_bias[:, :ef]
        bias = off_bias[:, ef:]                                      # sum_e gate_e * b2_e

        hn = h * scale + offset                                      # gate-weighted LN(h)

        # fc2: one matmul over the packed contraction = gate-weighted sum over experts.
        y = jnp.dot(hn.astype(jnp.bfloat16), w2_ref[...], preferred_element_type=f32) + bias
        out_ref[...] = y                                             # lane-dense (O padded to 128)

    return kernel


# ----------------------------------------------------------------------------------
# VMEM-budget-aware tiling
# ----------------------------------------------------------------------------------
def _vmem_limit_bytes():
    phys = 64 * 1024 * 1024                       # conservative fallback (v7x physical VMEM)
    try:
        info = pltpu.get_tpu_info()
        for attr in ("vmem_capacity_bytes", "vmem_size_bytes", "vmem_bytes"):
            v = getattr(info, attr, None)
            if v:
                phys = int(v)
                break
    except Exception:
        pass
    # Headroom for Mosaic-internal scratch: 48 MiB on v7x (64 MiB), 112 MiB on v5e/v6e (128 MiB).
    return int(min(phys - 16 * 1024 * 1024, 112 * 1024 * 1024))


def _pick_tm(bn, d, ef, e_pad, o_pad, budget_bytes):
    # Packed weights (constant index maps -> VMEM resident; x2 in case still double-buffered).
    weight_bytes = 2 * (d * ef * 2 + ef * o_pad * 2 + ef * 4
                        + ef * e_pad * 4 + e_pad * ef * 4
                        + 2 * e_pad * (ef + o_pad) * 4)
    # Per-token-row: double-buffered x / g / out tiles + f32 (tm,EF) intermediates headroom.
    per_row = (2 * (d * 2 + e_pad * 4 + o_pad * 4)
               + 6 * ef * 4 + 2 * (ef + o_pad) * 4)
    fallback_any = None
    fallback_two = None
    for cand in (1024, 512, 256, 128, 64, 32, 16, 8):
        if cand > bn or bn % cand != 0:
            continue
        if weight_bytes + cand * per_row > budget_bytes:
            continue
        steps = bn // cand
        if fallback_any is None:
            fallback_any = cand
        if steps >= 2 and fallback_two is None:
            fallback_two = cand
        if steps >= 4 and steps % 2 == 0:   # keep both v7x TensorCores busy
            return cand
    if fallback_two is not None:
        return fallback_two
    if fallback_any is not None:
        return fallback_any
    return 8 if bn % 8 == 0 else bn


# ----------------------------------------------------------------------------------
# One-time parameter packing (hoisted out of the forward)
# ----------------------------------------------------------------------------------
def pack_expert_params(params, *, e_pad=8, lane=LANE):
    E, D, F = params["w1"].shape
    O = params["w2"].shape[-1]
    EF = E * F
    E_pad = max(e_pad, E)
    O_pad = max(lane, ((O + lane - 1) // lane) * lane)

    w1 = jnp.transpose(params["w1"], (1, 0, 2)).reshape(D, EF).astype(jnp.bfloat16)
    b1 = params["b1"].reshape(1, EF).astype(jnp.float32)
    lng = params["ln_g"].reshape(EF).astype(jnp.float32)
    lnb = params["ln_b"].reshape(EF).astype(jnp.float32)

    eye = jnp.eye(E, dtype=jnp.float32)
    seg = jnp.repeat(eye, F, axis=1)                                  # (E, EF), 0/1 blocks

    def pad_rows(m):
        return jnp.pad(m, ((0, E_pad - E), (0, 0)))

    pool = jnp.pad(jnp.repeat(eye, F, axis=0) / float(F), ((0, 0), (0, E_pad - E)))  # (EF,E_pad)
    scale_rhs = pad_rows(seg * lng[None, :])                          # (E_pad, EF) = seg*ln_g

    b2 = params["b2"].reshape(E, O).astype(jnp.float32)
    b2_pad = jnp.pad(b2, ((0, E_pad - E), (0, O_pad - O)))            # (E_pad, O_pad)
    top = jnp.concatenate([pad_rows(seg * lnb[None, :]), b2_pad], axis=1)
    bot = jnp.concatenate([pad_rows(seg * lng[None, :]),
                           jnp.zeros((E_pad, O_pad), jnp.float32)], axis=1)
    off_rhs = jnp.concatenate([top, bot], axis=0)                     # (2*E_pad, EF+O_pad)

    w2 = jnp.pad(params["w2"].reshape(EF, O), ((0, 0), (0, O_pad - O))).astype(jnp.bfloat16)
    return {"w1": w1, "b1": b1, "pool": pool, "scale_rhs": scale_rhs,
            "off_rhs": off_rhs, "w2": w2}


# ----------------------------------------------------------------------------------
# Pallas wrapper
# ----------------------------------------------------------------------------------
def moe_pallas(x2d_bf16, gate2d, packed, tm, *, approximate_gelu=False):
    BN, D = x2d_bf16.shape
    EF = packed["w1"].shape[1]
    E_pad = packed["pool"].shape[1]
    O_pad = packed["w2"].shape[1]

    kernel = _make_moe_kernel(EF, E_pad, approximate_gelu)
    return pl.pallas_call(
        kernel,
        out_shape=jax.ShapeDtypeStruct((BN, O_pad), jnp.float32),
        grid_spec=pltpu.PrefetchScalarGridSpec(
            num_scalar_prefetch=0,
            grid=(BN // tm,),
            in_specs=[
                pl.BlockSpec((tm, D), lambda i: (i, 0)),          # x tile (bf16)
                pl.BlockSpec((tm, E_pad), lambda i: (i, 0)),      # gate tile (f32, E padded to 8)
                pl.BlockSpec((D, EF), lambda i: (0, 0)),          # w1 packed (bf16), VMEM resident
                pl.BlockSpec((1, EF), lambda i: (0, 0)),          # b1 packed
                pl.BlockSpec((EF, E_pad), lambda i: (0, 0)),      # pooling matrix (mean)
                pl.BlockSpec((E_pad, EF), lambda i: (0, 0)),      # scale RHS (seg * ln_g)
                pl.BlockSpec((2 * E_pad, EF + O_pad), lambda i: (0, 0)),  # offset+bias RHS
                pl.BlockSpec((EF, O_pad), lambda i: (0, 0)),      # w2 packed (bf16, O padded)
            ],
            out_specs=pl.BlockSpec((tm, O_pad), lambda i: (i, 0)),
            scratch_shapes=[pltpu.VMEM((tm, 2 * E_pad), jnp.float32)],  # combined-offset LHS
        ),
        compiler_params=pltpu.CompilerParams(
            dimension_semantics=("parallel",),
            vmem_limit_bytes=_vmem_limit_bytes(),
        ),
    )(x2d_bf16, gate2d, packed["w1"], packed["b1"], packed["pool"],
      packed["scale_rhs"], packed["off_rhs"], packed["w2"])


def _capacity_mask(x_gated, capacity_factor):
    # torch: _, idx = x_gated.topk(top_num, dim=-2); mask.scatter_(1, idx, 1)
    # Implemented as a threshold compare against the k-th top logit per (batch, expert)
    # (no (B,E,k,N) one_hot intermediate). Identical to scatter when there are no ties.
    B, N, E = x_gated.shape
    top_num = int(N * capacity_factor // E)
    if top_num <= 0:
        return jnp.zeros_like(x_gated)
    if top_num >= N:
        return jnp.ones_like(x_gated)
    logits_t = jnp.swapaxes(x_gated, 1, 2)                      # (B, E, N)
    kth = jax.lax.top_k(logits_t, top_num)[0][..., -1:]         # (B, E, 1)
    mask = (logits_t >= kth).astype(x_gated.dtype)              # (B, E, N)
    return jnp.swapaxes(mask, 1, 2)                             # (B, N, E)


def pamoe_forward_pallas(x, wg_t, bg, packed, capacity_factor, out_dim, tm=None,
                         approximate_gelu=False):
    B, N, D = x.shape
    BN = B * N
    E = wg_t.shape[1]
    EF = packed["w1"].shape[1]
    E_pad = packed["pool"].shape[1]
    O_pad = packed["w2"].shape[1]

    if tm is None:
        tm = _pick_tm(BN, D, EF, E_pad, O_pad, _vmem_limit_bytes())
    assert BN % tm == 0 and tm % 8 == 0, "token tile must divide B*N and be a multiple of 8"

    x2d = x.reshape(BN, D)

    # Gate: tiny (D x E) projection + softmax + capacity mask — cheaper in XLA than a
    # dedicated pallas_call. Kept f32 so routing is exact.
    x_gated = (jnp.dot(x2d, wg_t) + bg).reshape(B, N, E)
    gate_scores = jax.nn.softmax(x_gated, axis=-1) * _capacity_mask(x_gated, capacity_factor)
    gate2d = gate_scores.reshape(BN, E).astype(jnp.float32)
    gate2d = jnp.pad(gate2d, ((0, 0), (0, E_pad - E)))          # pad experts (6 -> 8)

    moe_pad = moe_pallas(x2d.astype(jnp.bfloat16), gate2d, packed, tm,
                         approximate_gelu=approximate_gelu)
    moe = moe_pad[:, :out_dim].reshape(B, N, out_dim)           # drop O padding outside kernel
    return moe, x_gated


# ----------------------------------------------------------------------------------
# Pure-JAX f32 reference (module semantics) for verification
# ----------------------------------------------------------------------------------
def pamoe_forward_ref(x, params, capacity_factor):
    B, N, D = x.shape
    E = params["wg_t"].shape[1]
    x_gated = jnp.einsum("bnd,de->bne", x, params["wg_t"]) + params["bg"][0]
    gate_scores = jax.nn.softmax(x_gated, axis=-1) * _capacity_mask(x_gated, capacity_factor)
    outs = []
    for e in range(E):
        h = x @ params["w1"][e] + params["b1"][e, 0]
        h = jax.nn.gelu(h, approximate=False)
        mu = h.mean(-1, keepdims=True)
        var = ((h - mu) ** 2).mean(-1, keepdims=True)
        h = (h - mu) * jax.lax.rsqrt(var + LN_EPS) * params["ln_g"][e, 0] + params["ln_b"][e, 0]
        outs.append(h @ params["w2"][e] + params["b2"][e, 0])
    stacked = jnp.stack(outs, axis=-1)                          # (B, N, O, E)
    moe = jnp.sum(gate_scores[:, :, None, :] * stacked, axis=-1)
    return moe, x_gated


# ----------------------------------------------------------------------------------
# Deterministic parameter init
# ----------------------------------------------------------------------------------
def init_params(key, dim, num_experts, ffn_dim, out_dim):
    ks = jax.random.split(key, 6)
    s = 0.05
    return {
        "wg_t": s * jax.random.normal(ks[0], (dim, num_experts), jnp.float32),
        "bg":   s * jax.random.normal(ks[5], (1, num_experts), jnp.float32),
        "w1":   s * jax.random.normal(ks[1], (num_experts, dim, ffn_dim), jnp.float32),
        "b1":   s * jax.random.normal(ks[2], (num_experts, 1, ffn_dim), jnp.float32),
        "ln_g": jnp.ones((num_experts, 1, ffn_dim), jnp.float32),
        "ln_b": jnp.zeros((num_experts, 1, ffn_dim), jnp.float32),
        "w2":   s * jax.random.normal(ks[3], (num_experts, ffn_dim, out_dim), jnp.float32),
        "b2":   s * jax.random.normal(ks[4], (num_experts, 1, out_dim), jnp.float32),
    }


if __name__ == "__main__":
    # PAMoE(dim=32, num_expert_extra=2, num_expert_proto=4, capacity_factor=1.0,
    #       out_dim=None -> 32, ffn_mult=2)
    B, N, dim = 2, 8, 32
    num_expert_extra, num_expert_proto = 2, 4
    E = num_expert_extra + num_expert_proto            # 6 experts
    ffn_dim = dim * 2
    out_dim = dim
    capacity_factor = 1.0

    key = jax.random.PRNGKey(0)
    kx, kp = jax.random.split(key)
    x = jax.random.normal(kx, (B, N, dim), jnp.float32)
    params = init_params(kp, dim, E, ffn_dim, out_dim)

    # Packing (transposes, bf16 casts, block-diag matrices) runs ONCE, outside the forward.
    packed = pack_expert_params(params)

    fwd = jax.jit(lambda xx: pamoe_forward_pallas(
        xx, params["wg_t"], params["bg"], packed, capacity_factor, out_dim))

    moe_out, x_gated = fwd(x)
    jax.block_until_ready((moe_out, x_gated))

    moe_ref, xg_ref = pamoe_forward_ref(x, params, capacity_factor)
    # Gate logits are pure f32 XLA -> tight check.
    np.testing.assert_allclose(np.asarray(x_gated), np.asarray(xg_ref), rtol=1e-4, atol=1e-5)
    # MoE output uses bf16 MXU operands with f32 accumulation -> looser tolerance vs f32 ref.
    np.testing.assert_allclose(np.asarray(moe_out), np.asarray(moe_ref), rtol=2e-2, atol=2e-2)

    print("KERNEL_OK")
</pallas_src>

<mosaic_0001>
module attributes {stable_mosaic.version = 11 : i64} {
  func.func @kernel(%arg0: i32, %arg1: memref<8x32xbf16, #tpu.memory_space<vmem>>, %arg2: memref<8x8xf32, #tpu.memory_space<vmem>>, %arg3: memref<32x384xbf16, #tpu.memory_space<vmem>>, %arg4: memref<1x384xf32, #tpu.memory_space<vmem>>, %arg5: memref<384x8xf32, #tpu.memory_space<vmem>>, %arg6: memref<8x384xf32, #tpu.memory_space<vmem>>, %arg7: memref<16x512xf32, #tpu.memory_space<vmem>>, %arg8: memref<384x128xbf16, #tpu.memory_space<vmem>>, %arg9: memref<8x128xf32, #tpu.memory_space<vmem>>, %arg10: memref<8x16xf32, #tpu.memory_space<vmem>>) attributes {dimension_semantics = [#tpu.dimension_semantics<parallel>], iteration_bounds = array<i64: 2>, scalar_prefetch = 0 : i64, scratch_operands = 1 : i64, tpu.core_type = #tpu.core_type<tc>, window_params = [{transform_indices = @transform_0, window_bounds = array<i64: 8, 32>}, {transform_indices = @transform_1, window_bounds = array<i64: 8, 8>}, {pipeline_mode = #tpu.pipeline_mode<synchronous>, transform_indices = @transform_2, window_bounds = array<i64: 32, 384>}, {pipeline_mode = #tpu.pipeline_mode<synchronous>, transform_indices = @transform_3, window_bounds = array<i64: 1, 384>}, {pipeline_mode = #tpu.pipeline_mode<synchronous>, transform_indices = @transform_4, window_bounds = array<i64: 384, 8>}, {pipeline_mode = #tpu.pipeline_mode<synchronous>, transform_indices = @transform_5, window_bounds = array<i64: 8, 384>}, {pipeline_mode = #tpu.pipeline_mode<synchronous>, transform_indices = @transform_6, window_bounds = array<i64: 16, 512>}, {pipeline_mode = #tpu.pipeline_mode<synchronous>, transform_indices = @transform_7, window_bounds = array<i64: 384, 128>}, {transform_indices = @transform_8, window_bounds = array<i64: 8, 128>}]} {
    %c0 = arith.constant 0 : index
    %c0_0 = arith.constant 0 : index
    %0 = vector.load %arg1[%c0, %c0_0] : memref<8x32xbf16, #tpu.memory_space<vmem>>, vector<8x32xbf16>
    %c0_1 = arith.constant 0 : index
    %c0_2 = arith.constant 0 : index
    %1 = vector.load %arg3[%c0_1, %c0_2] : memref<32x384xbf16, #tpu.memory_space<vmem>>, vector<32x384xbf16>
    %cst = arith.constant dense<0.000000e+00> : vector<8x384xf32>
    %2 = tpu.matmul %0, %1, %cst {dimension_numbers = #tpu.dot_dimension_numbers<[1], [0], [0], [1], [0, 0, 1, 1], [], []>} : vector<8x32xbf16>, vector<32x384xbf16>, vector<8x384xf32> -> vector<8x384xf32>
    %c0_3 = arith.constant 0 : index
    %c0_4 = arith.constant 0 : index
    %3 = vector.load %arg4[%c0_3, %c0_4] : memref<1x384xf32, #tpu.memory_space<vmem>>, vector<1x384xf32>
    %4 = vector.broadcast %3 : vector<1x384xf32> to vector<8x384xf32>
    %5 = arith.addf %2, %4 : vector<8x384xf32>
    %cst_5 = arith.constant 5.000000e-01 : f32
    %6 = vector.broadcast %cst_5 : f32 to vector<8x384xf32>
    %7 = arith.mulf %6, %5 : vector<8x384xf32>
    %cst_6 = arith.constant 0.707106769 : f32
    %8 = vector.broadcast %cst_6 : f32 to vector<8x384xf32>
    %9 = arith.mulf %5, %8 : vector<8x384xf32>
    %10 = math.absf %9 : vector<8x384xf32>
    %cst_7 = arith.constant 0.327591091 : f32
    %11 = vector.broadcast %cst_7 : f32 to vector<8x384xf32>
    %12 = arith.mulf %11, %10 : vector<8x384xf32>
    %cst_8 = arith.constant 1.000000e+00 : f32
    %13 = vector.broadcast %cst_8 : f32 to vector<8x384xf32>
    %14 = arith.addf %13, %12 : vector<8x384xf32>
    %cst_9 = arith.constant 1.000000e+00 : f32
    %15 = vector.broadcast %cst_9 : f32 to vector<8x384xf32>
    %16 = arith.divf %15, %14 : vector<8x384xf32>
    %cst_10 = arith.constant 1.06140542 : f32
    %17 = vector.broadcast %cst_10 : f32 to vector<8x384xf32>
    %18 = arith.mulf %17, %16 : vector<8x384xf32>
    %cst_11 = arith.constant -1.45315206 : f32
    %19 = vector.broadcast %cst_11 : f32 to vector<8x384xf32>
    %20 = arith.addf %18, %19 : vector<8x384xf32>
    %21 = arith.mulf %20, %16 : vector<8x384xf32>
    %cst_12 = arith.constant 1.42141378 : f32
    %22 = vector.broadcast %cst_12 : f32 to vector<8x384xf32>
    %23 = arith.addf %21, %22 : vector<8x384xf32>
    %24 = arith.mulf %23, %16 : vector<8x384xf32>
    %cst_13 = arith.constant -0.284496725 : f32
    %25 = vector.broadcast %cst_13 : f32 to vector<8x384xf32>
    %26 = arith.addf %24, %25 : vector<8x384xf32>
    %27 = arith.mulf %26, %16 : vector<8x384xf32>
    %cst_14 = arith.constant 0.254829586 : f32
    %28 = vector.broadcast %cst_14 : f32 to vector<8x384xf32>
    %29 = arith.addf %27, %28 : vector<8x384xf32>
    %30 = arith.mulf %29, %16 : vector<8x384xf32>
    %cst_15 = arith.constant 0.000000e+00 : f32
    %31 = vector.broadcast %cst_15 : f32 to vector<8x384xf32>
    %32 = arith.subf %31, %10 : vector<8x384xf32>
    %33 = arith.mulf %32, %10 : vector<8x384xf32>
    %34 = math.exp %33 : vector<8x384xf32>
    %35 = arith.mulf %30, %34 : vector<8x384xf32>
    %cst_16 = arith.constant 1.000000e+00 : f32
    %36 = vector.broadcast %cst_16 : f32 to vector<8x384xf32>
    %37 = arith.subf %36, %35 : vector<8x384xf32>
    %cst_17 = arith.constant 0.000000e+00 : f32
    %38 = vector.broadcast %cst_17 : f32 to vector<8x384xf32>
    %39 = arith.cmpf olt, %9, %38 : vector<8x384xf32>
    %cst_18 = arith.constant 0.000000e+00 : f32
    %40 = vector.broadcast %cst_18 : f32 to vector<8x384xf32>
    %41 = arith.subf %40, %37 : vector<8x384xf32>
    %42 = arith.select %39, %41, %37 : vector<8x384xi1>, vector<8x384xf32>
    %cst_19 = arith.constant 1.000000e+00 : f32
    %43 = vector.broadcast %cst_19 : f32 to vector<8x384xf32>
    %44 = arith.addf %43, %42 : vector<8x384xf32>
    %45 = arith.mulf %7, %44 : vector<8x384xf32>
    %c0_20 = arith.constant 0 : index
    %c0_21 = arith.constant 0 : index
    %46 = vector.load %arg5[%c0_20, %c0_21] : memref<384x8xf32, #tpu.memory_space<vmem>>, vector<384x8xf32>
    %cst_22 = arith.constant dense<0.000000e+00> : vector<8x8xf32>
    %47 = tpu.matmul %45, %46, %cst_22 {dimension_numbers = #tpu.dot_dimension_numbers<[1], [0], [0], [1], [0, 0, 1, 1], [], []>} : vector<8x384xf32>, vector<384x8xf32>, vector<8x8xf32> -> vector<8x8xf32>
    %48 = arith.mulf %45, %45 : vector<8x384xf32>
    %cst_23 = arith.constant dense<0.000000e+00> : vector<8x8xf32>
    %49 = tpu.matmul %48, %46, %cst_23 {dimension_numbers = #tpu.dot_dimension_numbers<[1], [0], [0], [1], [0, 0, 1, 1], [], []>} : vector<8x384xf32>, vector<384x8xf32>, vector<8x8xf32> -> vector<8x8xf32>
    %50 = arith.mulf %47, %47 : vector<8x8xf32>
    %51 = arith.subf %49, %50 : vector<8x8xf32>
    %cst_24 = arith.constant 0.000000e+00 : f32
    %52 = vector.broadcast %cst_24 : f32 to vector<8x8xf32>
    %53 = arith.maximumf %51, %52 : vector<8x8xf32>
    %c0_25 = arith.constant 0 : index
    %c0_26 = arith.constant 0 : index
    %54 = vector.load %arg2[%c0_25, %c0_26] : memref<8x8xf32, #tpu.memory_space<vmem>>, vector<8x8xf32>
    %cst_27 = arith.constant 9.99999974E-6 : f32
    %55 = vector.broadcast %cst_27 : f32 to vector<8x8xf32>
    %56 = arith.addf %53, %55 : vector<8x8xf32>
    %57 = math.rsqrt %56 : vector<8x8xf32>
    %58 = arith.mulf %54, %57 : vector<8x8xf32>
    %c0_28 = arith.constant 0 : index
    %c0_29 = arith.constant 0 : index
    %59 = vector.load %arg6[%c0_28, %c0_29] : memref<8x384xf32, #tpu.memory_space<vmem>>, vector<8x384xf32>
    %cst_30 = arith.constant dense<0.000000e+00> : vector<8x384xf32>
    %60 = tpu.matmul %58, %59, %cst_30 {dimension_numbers = #tpu.dot_dimension_numbers<[1], [0], [0], [1], [0, 0, 1, 1], [], []>} : vector<8x8xf32>, vector<8x384xf32>, vector<8x384xf32> -> vector<8x384xf32>
    %c0_31 = arith.constant 0 : index
    %c0_32 = arith.constant 0 : index
    %61 = vector.load %arg10[%c0_31, %c0_32] : memref<8x16xf32, #tpu.memory_space<vmem>>, vector<8x8xf32>
    tpu.vector_store %arg10[%c0_31, %c0_32], %54 {strides = array<i32>} : memref<8x16xf32, #tpu.memory_space<vmem>>, vector<8x8xf32>,
    %62 = arith.mulf %58, %47 : vector<8x8xf32>
    %cst_33 = arith.constant 0.000000e+00 : f32
    %63 = vector.broadcast %cst_33 : f32 to vector<8x8xf32>
    %64 = arith.subf %63, %62 : vector<8x8xf32>
    %c0_34 = arith.constant 0 : index
    %c8 = arith.constant 8 : index
    %65 = vector.load %arg10[%c0_34, %c8] : memref<8x16xf32, #tpu.memory_space<vmem>>, vector<8x8xf32>
    tpu.vector_store %arg10[%c0_34, %c8], %64 {strides = array<i32>} : memref<8x16xf32, #tpu.memory_space<vmem>>, vector<8x8xf32>,
    %c0_35 = arith.constant 0 : index
    %c0_36 = arith.constant 0 : index
    %66 = vector.load %arg10[%c0_35, %c0_36] : memref<8x16xf32, #tpu.memory_space<vmem>>, vector<8x16xf32>
    %c0_37 = arith.constant 0 : index
    %c0_38 = arith.constant 0 : index
    %67 = vector.load %arg7[%c0_37, %c0_38] : memref<16x512xf32, #tpu.memory_space<vmem>>, vector<16x512xf32>
    %cst_39 = arith.constant dense<0.000000e+00> : vector<8x512xf32>
    %68 = tpu.matmul %66, %67, %cst_39 {dimension_numbers = #tpu.dot_dimension_numbers<[1], [0], [0], [1], [0, 0, 1, 1], [], []>} : vector<8x16xf32>, vector<16x512xf32>, vector<8x512xf32> -> vector<8x512xf32>
    %69 = vector.extract_strided_slice %68 {offsets = [0, 0], sizes = [8, 384], strides = [1, 1]} : vector<8x512xf32> to vector<8x384xf32>
    %70 = vector.extract_strided_slice %68 {offsets = [0, 384], sizes = [8, 128], strides = [1, 1]} : vector<8x512xf32> to vector<8x128xf32>
    %71 = arith.mulf %45, %60 : vector<8x384xf32>
    %72 = arith.addf %71, %69 : vector<8x384xf32>
    %73 = arith.truncf %72 : vector<8x384xf32> to vector<8x384xbf16>
    %c0_40 = arith.constant 0 : index
    %c0_41 = arith.constant 0 : index
    %74 = vector.load %arg8[%c0_40, %c0_41] : memref<384x128xbf16, #tpu.memory_space<vmem>>, vector<384x128xbf16>
    %cst_42 = arith.constant dense<0.000000e+00> : vector<8x128xf32>
    %75 = tpu.matmul %73, %74, %cst_42 {dimension_numbers = #tpu.dot_dimension_numbers<[1], [0], [0], [1], [0, 0, 1, 1], [], []>} : vector<8x384xbf16>, vector<384x128xbf16>, vector<8x128xf32> -> vector<8x128xf32>
    %76 = arith.addf %75, %70 : vector<8x128xf32>
    %c0_43 = arith.constant 0 : index
    %c0_44 = arith.constant 0 : index
    %77 = vector.load %arg9[%c0_43, %c0_44] : memref<8x128xf32, #tpu.memory_space<vmem>>, vector<8x128xf32>
    tpu.vector_store %arg9[%c0_43, %c0_44], %76 {strides = array<i32>} : memref<8x128xf32, #tpu.memory_space<vmem>>, vector<8x128xf32>,
    return
  }
  func.func @transform_0(%arg0: i32) -> (i32, i32) {
    %c0_i32 = arith.constant 0 : i32
    %c0_i32_0 = arith.constant 0 : i32
    return %arg0, %c0_i32 : i32, i32
  }
  func.func @transform_1(%arg0: i32) -> (i32, i32) {
    %c0_i32 = arith.constant 0 : i32
    %c0_i32_0 = arith.constant 0 : i32
    return %arg0, %c0_i32 : i32, i32
  }
  func.func @transform_2(%arg0: i32) -> (i32, i32) {
    %c0_i32 = arith.constant 0 : i32
    %c0_i32_0 = arith.constant 0 : i32
    %c0_i32_1 = arith.constant 0 : i32
    return %c0_i32, %c0_i32_0 : i32, i32
  }
  func.func @transform_3(%arg0: i32) -> (i32, i32) {
    %c0_i32 = arith.constant 0 : i32
    %c0_i32_0 = arith.constant 0 : i32
    %c0_i32_1 = arith.constant 0 : i32
    return %c0_i32, %c0_i32_0 : i32, i32
  }
  func.func @transform_4(%arg0: i32) -> (i32, i32) {
    %c0_i32 = arith.constant 0 : i32
    %c0_i32_0 = arith.constant 0 : i32
    %c0_i32_1 = arith.constant 0 : i32
    return %c0_i32, %c0_i32_0 : i32, i32
  }
  func.func @transform_5(%arg0: i32) -> (i32, i32) {
    %c0_i32 = arith.constant 0 : i32
    %c0_i32_0 = arith.constant 0 : i32
    %c0_i32_1 = arith.constant 0 : i32
    return %c0_i32, %c0_i32_0 : i32, i32
  }
  func.func @transform_6(%arg0: i32) -> (i32, i32) {
    %c0_i32 = arith.constant 0 : i32
    %c0_i32_0 = arith.constant 0 : i32
    %c0_i32_1 = arith.constant 0 : i32
    return %c0_i32, %c0_i32_0 : i32, i32
  }
  func.func @transform_7(%arg0: i32) -> (i32, i32) {
    %c0_i32 = arith.constant 0 : i32
    %c0_i32_0 = arith.constant 0 : i32
    %c0_i32_1 = arith.constant 0 : i32
    return %c0_i32, %c0_i32_0 : i32, i32
  }
  func.func @transform_8(%arg0: i32) -> (i32, i32) {
    %c0_i32 = arith.constant 0 : i32
    %c0_i32_0 = arith.constant 0 : i32
    return %arg0, %c0_i32 : i32, i32
  }
}

</mosaic_0001>

<llo_original>
// kernel: _lambda_.1
$region0: #{_lambda_.1}
  #allocation0 [shape = 'u32[]', space=smem, size = 0x4, offset = 0x4, fixed_abs, tag = 'smem constant byte address 0x4 - core index']
  #allocation1 [shape = 'u32[144,128]{1,0:T(1,128)}', space=vmem, size = 0x12000, scoped, tag = 'internal scratch']
  #allocation2 [shape = 'f32[8,16]{1,0:T(8,128)}', space=vmem, size = 0x1000, scoped, tag = 'scratch operand']
  %s0 = inlined_call_operand.vmem [shape: bf16[16,32], index: 0, kind: input, shape index: {}]
  %s1 = inlined_call_operand.vmem [shape: f32[16,8], index: 1, kind: input, shape index: {}]
  %s2 = inlined_call_operand.vmem [shape: bf16[32,384], index: 2, kind: input, shape index: {}]
  %s3 = inlined_call_operand.vmem [shape: f32[1,384], index: 3, kind: input, shape index: {}]
  %s4 = inlined_call_operand.vmem [shape: f32[384,8], index: 4, kind: input, shape index: {}]
  %s5 = inlined_call_operand.vmem [shape: f32[8,384], index: 5, kind: input, shape index: {}]
  %s6 = inlined_call_operand.vmem [shape: f32[16,512], index: 6, kind: input, shape index: {}]
  %s7 = inlined_call_operand.hbm [shape: bf16[384,128], index: 7, kind: input, shape index: {}]
  %s8 = inlined_call_operand.vmem [shape: f32[16,128], index: 8, kind: output, shape index: {}]
  %s9 = sld [smem:[#allocation0]]
  $region69: #{_lambda_.1} parent=0
    _
  %s11 = ssub.s32 1, %s9
  %s12 = scalar_select 0, %s11, %s9
  $region1: #{_lambda_.1} parent=0
    #allocation3 [shape = 'u8[98304]{0}', space=vmem, size = 0x18000, scoped, tag = 'input window, operand 7, single buffered']
    #allocation4 [shape = 's32[2]{0}', space=sflag, size = 0x8, scoped, tag = 'scoped memory for _lambda_.1']
    %13 = vsyncpa [#allocation4], 0
    loop: start=0, step=1, limit=4
    $region2: #{_lambda_.1} parent=1 // loop_pre_header
      _
    $region3: #{_lambda_.1} parent=1 // loop_header
      %s15 = sphi 0, %s19
      %p16 = scmp.ge.s32.totalorder %s15, 4
      %s25 = sphi 0, %s27
      %s28 = sphi 0, %s25
      %s29 = sphi 0, %s28
      %s45 = sphi 0, %s29
      %s51 = sphi 0, %s53
      %s54 = sphi 0, %s51
      %s55 = sphi 0, %s54
      %s71 = sphi 0, %s55
      %s75 = sphi 0, %s75
      %s77 = sphi 0, %s75
      %s78 = sphi 0, %s77
      %s92 = sphi 0, %s78
      %s96 = sphi 0, %s96
      %s98 = sphi 0, %s96
      %s99 = sphi 0, %s98
      %s113 = sphi 0, %s99
      %s117 = sphi 0, %s117
      %s119 = sphi 0, %s117
      %s120 = sphi 0, %s119
      %s134 = sphi 0, %s120
      %s138 = sphi 0, %s138
      %s140 = sphi 0, %s138
      %s141 = sphi 0, %s140
      %s155 = sphi 0, %s141
      %s159 = sphi 0, %s159
      %s161 = sphi 0, %s159
      %s162 = sphi 0, %s161
      %s176 = sphi 0, %s162
      %s180 = sphi 0, %s180
      %s182 = sphi 0, %s180
      %s183 = sphi 0, %s182
      %s197 = sphi 0, %s183
      %s203 = sphi 0, %s205
      %s206 = sphi 0, %s203
      %s207 = sphi 0, %s206
      %s223 = sphi 0, %s207
    $region4: #{_lambda_.1} parent=1 // loop_header_branch
      %18 = sbr.rel (%p16) target = $region8
    $region5: #{_lambda_.1} parent=1 // loop_body
      %s20 = ssub.s32 %s15, 1
      %s21 = ssub.s32 %s15, 2
      %s22 = sadd.s32 %s15, 1
      %s23 = ssub.s32 %s15, %s22
      %p24 = scmp.eq.s32.totalorder %s23, 0
      %s26 = sadd.s32 %s25, 1
      %s27 = scalar_select %p24, %s25, %s26
      %p30 = pneg %p24
      %p31 = scmp.eq.s32.totalorder %s15, 1
      %p32 = por %p30, %p31
      %p33 = scmp.ne.s32.totalorder %s25, %s28
      %p34 = scmp.eq.s32.totalorder %s15, 0
      %p35 = por %p33, %p34
      %p36 = scmp.ne.s32.totalorder %s25, %s28
      %p37 = scmp.eq.s32.totalorder %s20, 1
      %p38 = por %p36, %p37
      %p39 = scmp.ne.s32.totalorder %s28, %s29
      %p40 = scmp.eq.s32.totalorder %s20, 0
      %p41 = por %p39, %p40
      %p42 = scmp.ne.s32.totalorder %s28, %s29
      %p43 = scmp.eq.s32.totalorder %s21, 1
      %p44 = por %p42, %p43
      %p46 = scmp.ne.s32.totalorder %s29, %s45
      %p47 = scmp.eq.s32.totalorder %s21, 0
      %p48 = por %p46, %p47
      %s49 = ssub.s32 %s15, %s22
      %p50 = scmp.eq.s32.totalorder %s49, 0
      %s52 = sadd.s32 %s51, 1
      %s53 = scalar_select %p50, %s51, %s52
      %p56 = pneg %p50
      %p57 = scmp.eq.s32.totalorder %s15, 1
      %p58 = por %p56, %p57
      %p59 = scmp.ne.s32.totalorder %s51, %s54
      %p60 = scmp.eq.s32.totalorder %s15, 0
      %p61 = por %p59, %p60
      %p62 = scmp.ne.s32.totalorder %s51, %s54
      %p63 = scmp.eq.s32.totalorder %s20, 1
      %p64 = por %p62, %p63
      %p65 = scmp.ne.s32.totalorder %s54, %s55
      %p66 = scmp.eq.s32.totalorder %s20, 0
      %p67 = por %p65, %p66
      %p68 = scmp.ne.s32.totalorder %s54, %s55
      %p69 = scmp.eq.s32.totalorder %s21, 1
      %p70 = por %p68, %p69
      %p72 = scmp.ne.s32.totalorder %s55, %s71
      %p73 = scmp.eq.s32.totalorder %s21, 0
      %p74 = por %p72, %p73
      %s76 = sadd.s32 %s75, 1
      %p79 = scmp.eq.s32.totalorder %s15, 1
      %p80 = scmp.ne.s32.totalorder %s75, %s77
      %p81 = scmp.eq.s32.totalorder %s15, 0
      %p82 = por %p80, %p81
      %p83 = scmp.ne.s32.totalorder %s75, %s77
      %p84 = scmp.eq.s32.totalorder %s20, 1
      %p85 = por %p83, %p84
      %p86 = scmp.ne.s32.totalorder %s77, %s78
      %p87 = scmp.eq.s32.totalorder %s20, 0
      %p88 = por %p86, %p87
      %p89 = scmp.ne.s32.totalorder %s77, %s78
      %p90 = scmp.eq.s32.totalorder %s21, 1
      %p91 = por %p89, %p90
      %p93 = scmp.ne.s32.totalorder %s78, %s92
      %p94 = scmp.eq.s32.totalorder %s21, 0
      %p95 = por %p93, %p94
      %s97 = sadd.s32 %s96, 1
      %p100 = scmp.eq.s32.totalorder %s15, 1
      %p101 = scmp.ne.s32.totalorder %s96, %s98
      %p102 = scmp.eq.s32.totalorder %s15, 0
      %p103 = por %p101, %p102
      %p104 = scmp.ne.s32.totalorder %s96, %s98
      %p105 = scmp.eq.s32.totalorder %s20, 1
      %p106 = por %p104, %p105
      %p107 = scmp.ne.s32.totalorder %s98, %s99
      %p108 = scmp.eq.s32.totalorder %s20, 0
      %p109 = por %p107, %p108
      %p110 = scmp.ne.s32.totalorder %s98, %s99
      %p111 = scmp.eq.s32.totalorder %s21, 1
      %p112 = por %p110, %p111
      %p114 = scmp.ne.s32.totalorder %s99, %s113
      %p115 = scmp.eq.s32.totalorder %s21, 0
      %p116 = por %p114, %p115
      %s118 = sadd.s32 %s117, 1
      %p121 = scmp.eq.s32.totalorder %s15, 1
      %p122 = scmp.ne.s32.totalorder %s117, %s119
      %p123 = scmp.eq.s32.totalorder %s15, 0
      %p124 = por %p122, %p123
      %p125 = scmp.ne.s32.totalorder %s117, %s119
      %p126 = scmp.eq.s32.totalorder %s20, 1
      %p127 = por %p125, %p126
      %p128 = scmp.ne.s32.totalorder %s119, %s120
      %p129 = scmp.eq.s32.totalorder %s20, 0
      %p130 = por %p128, %p129
      %p131 = scmp.ne.s32.totalorder %s119, %s120
      %p132 = scmp.eq.s32.totalorder %s21, 1
      %p133 = por %p131, %p132
      %p135 = scmp.ne.s32.totalorder %s120, %s134
      %p136 = scmp.eq.s32.totalorder %s21, 0
      %p137 = por %p135, %p136
      %s139 = sadd.s32 %s138, 1
      %p142 = scmp.eq.s32.totalorder %s15, 1
      %p143 = scmp.ne.s32.totalorder %s138, %s140
      %p144 = scmp.eq.s32.totalorder %s15, 0
      %p145 = por %p143, %p144
      %p146 = scmp.ne.s32.totalorder %s138, %s140
      %p147 = scmp.eq.s32.totalorder %s20, 1
      %p148 = por %p146, %p147
      %p149 = scmp.ne.s32.totalorder %s140, %s141
      %p150 = scmp.eq.s32.totalorder %s20, 0
      %p151 = por %p149, %p150
      %p152 = scmp.ne.s32.totalorder %s140, %s141
      %p153 = scmp.eq.s32.totalorder %s21, 1
      %p154 = por %p152, %p153
      %p156 = scmp.ne.s32.totalorder %s141, %s155
      %p157 = scmp.eq.s32.totalorder %s21, 0
      %p158 = por %p156, %p157
      %s160 = sadd.s32 %s159, 1
      %p163 = scmp.eq.s32.totalorder %s15, 1
      %p164 = scmp.ne.s32.totalorder %s159, %s161
      %p165 = scmp.eq.s32.totalorder %s15, 0
      %p166 = por %p164, %p165
      %p167 = scmp.ne.s32.totalorder %s159, %s161
      %p168 = scmp.eq.s32.totalorder %s20, 1
      %p169 = por %p167, %p168
      %p170 = scmp.ne.s32.totalorder %s161, %s162
      %p171 = scmp.eq.s32.totalorder %s20, 0
      %p172 = por %p170, %p171
      %p173 = scmp.ne.s32.totalorder %s161, %s162
      %p174 = scmp.eq.s32.totalorder %s21, 1
      %p175 = por %p173, %p174
      %p177 = scmp.ne.s32.totalorder %s162, %s176
      %p178 = scmp.eq.s32.totalorder %s21, 0
      %p179 = por %p177, %p178
      %s181 = sadd.s32 %s180, 1
      %p184 = scmp.eq.s32.totalorder %s15, 1
      %p185 = scmp.ne.s32.totalorder %s180, %s182
      %p186 = scmp.eq.s32.totalorder %s15, 0
      %p187 = por %p185, %p186
      %p188 = scmp.ne.s32.totalorder %s180, %s182
      %p189 = scmp.eq.s32.totalorder %s20, 1
      %p190 = por %p188, %p189
      %p191 = scmp.ne.s32.totalorder %s182, %s183
      %p192 = scmp.eq.s32.totalorder %s20, 0
      %p193 = por %p191, %p192
      %p194 = scmp.ne.s32.totalorder %s182, %s183
      %p195 = scmp.eq.s32.totalorder %s21, 1
      %p196 = por %p194, %p195
      %p198 = scmp.ne.s32.totalorder %s183, %s197
      %p199 = scmp.eq.s32.totalorder %s21, 0
      %p200 = por %p198, %p199
      %s201 = ssub.s32 %s15, %s22
      %p202 = scmp.eq.s32.totalorder %s201, 0
      %s204 = sadd.s32 %s203, 1
      %s205 = scalar_select %p202, %s203, %s204
      %p208 = pneg %p202
      %p209 = scmp.eq.s32.totalorder %s15, 1
      %p210 = por %p208, %p209
      %p211 = scmp.ne.s32.totalorder %s203, %s206
      %p212 = scmp.eq.s32.totalorder %s15, 0
      %p213 = por %p211, %p212
      %p214 = scmp.ne.s32.totalorder %s203, %s206
      %p215 = scmp.eq.s32.totalorder %s20, 1
      %p216 = por %p214, %p215
      %p217 = scmp.ne.s32.totalorder %s206, %s207
      %p218 = scmp.eq.s32.totalorder %s20, 0
      %p219 = por %p217, %p218
      %p220 = scmp.ne.s32.totalorder %s206, %s207
      %p221 = scmp.eq.s32.totalorder %s21, 1
      %p222 = por %p220, %p221
      %p224 = scmp.ne.s32.totalorder %s207, %s223
      %p225 = scmp.eq.s32.totalorder %s21, 0
      %p226 = por %p224, %p225
      %p227 = scmp.le.s32.totalorder 1, %s15
      %p228 = scmp.lt.s32.totalorder %s15, 3
      %p229 = pnand %p227, %p228
      %p230 = pneg %p229
      // Predicated region
      $region9: #{_lambda_.1} parent=5 // pred_check
        _
      $region10: #{_lambda_.1} parent=5 // pred_check_branch
        %232 = sbr.rel (%p229) target = $region12
      $region11: #{_lambda_.1} parent=5 // pred_region
        %s233 = ssub.s32 %s15, 1
        // Predicated region
        $region13: #{_lambda_.1} parent=11 // pred_check
          %p234 = pneg %p88
        $region14: #{_lambda_.1} parent=11 // pred_check_branch
          %236 = sbr.rel (%p234) target = $region16
        $region15: #{_lambda_.1} parent=11 // pred_region
          _
        $region16: #{_lambda_.1} parent=11 // pred_fallthru
          _
        // Predicated region
        $region17: #{_lambda_.1} parent=11 // pred_check
          %p237 = pneg %p109
        $region18: #{_lambda_.1} parent=11 // pred_check_branch
          %239 = sbr.rel (%p237) target = $region20
        $region19: #{_lambda_.1} parent=11 // pred_region
          _
        $region20: #{_lambda_.1} parent=11 // pred_fallthru
          _
        // Predicated region
        $region21: #{_lambda_.1} parent=11 // pred_check
          %p240 = pneg %p130
        $region22: #{_lambda_.1} parent=11 // pred_check_branch
          %242 = sbr.rel (%p240) target = $region24
        $region23: #{_lambda_.1} parent=11 // pred_region
          _
        $region24: #{_lambda_.1} parent=11 // pred_fallthru
          _
        // Predicated region
        $region25: #{_lambda_.1} parent=11 // pred_check
          %p243 = pneg %p151
        $region26: #{_lambda_.1} parent=11 // pred_check_branch
          %245 = sbr.rel (%p243) target = $region28
        $region27: #{_lambda_.1} parent=11 // pred_region
          _
        $region28: #{_lambda_.1} parent=11 // pred_fallthru
          _
        // Predicated region
        $region29: #{_lambda_.1} parent=11 // pred_check
          %p246 = pneg %p172
        $region30: #{_lambda_.1} parent=11 // pred_check_branch
          %248 = sbr.rel (%p246) target = $region32
        $region31: #{_lambda_.1} parent=11 // pred_region
          _
        $region32: #{_lambda_.1} parent=11 // pred_fallthru
          _
        // Predicated region
        $region33: #{_lambda_.1} parent=11 // pred_check
          %p249 = pneg %p193
        $region34: #{_lambda_.1} parent=11 // pred_check_branch
          %251 = sbr.rel (%p249) target = $region36
        $region35: #{_lambda_.1} parent=11 // pred_region
          %s253 = ssub.s32 3072, 3072
          %254 = vsyncadd [#allocation4], %s253
          %s255 = sshll.u32 [#allocation3], 4
          %s256 = int_to_ptr.vmem [resolvable:$true] %s255
          %261 = dma.hbm_to_vmem [thread:$0]  %s7, 3072, %s256, [#allocation4], 64, 64, 4
        $region36: #{_lambda_.1} parent=11 // pred_fallthru
          _
      $region12: #{_lambda_.1} parent=5 // pred_fallthru
        _
      %p262 = scmp.lt.s32.totalorder %s15, 2
      // Predicated region
      $region37: #{_lambda_.1} parent=5 // pred_check
        %p263 = pneg %p262
      $region38: #{_lambda_.1} parent=5 // pred_check_branch
        %265 = sbr.rel (%p263) target = $region40
      $region39: #{_lambda_.1} parent=5 // pred_region
        // Predicated region
        $region41: #{_lambda_.1} parent=39 // pred_check
          %p266 = pneg %p35
        $region42: #{_lambda_.1} parent=39 // pred_check_branch
          %268 = sbr.rel (%p266) target = $region44
        $region43: #{_lambda_.1} parent=39 // pred_region
          %p269 = scmp.lt.s32.totalorder %s15, 1
          %s270 = scalar_select %p269, %s15, 1
          %s271 = smul.addr %s270, 4
          %s272 = scalar_lea.vmem %s0, %s271
        $region44: #{_lambda_.1} parent=39 // pred_fallthru
          _
        // Predicated region
        $region45: #{_lambda_.1} parent=39 // pred_check
          %p273 = pneg %p61
        $region46: #{_lambda_.1} parent=39 // pred_check_branch
          %275 = sbr.rel (%p273) target = $region48
        $region47: #{_lambda_.1} parent=39 // pred_region
          %p276 = scmp.lt.s32.totalorder %s15, 1
          %s277 = scalar_select %p276, %s15, 1
          %s278 = smul.addr %s277, 8
          %s279 = scalar_lea.vmem %s1, %s278
        $region48: #{_lambda_.1} parent=39 // pred_fallthru
          _
      $region40: #{_lambda_.1} parent=5 // pred_fallthru
        _
      %p280 = scmp.le.s32.totalorder 1, %s15
      %p281 = scmp.lt.s32.totalorder %s15, 3
      %p282 = pnand %p280, %p281
      %p283 = pneg %p282
      // Predicated region
      $region49: #{_lambda_.1} parent=5 // pred_check
        _
      $region50: #{_lambda_.1} parent=5 // pred_check_branch
        %285 = sbr.rel (%p282) target = $region52
      $region51: #{_lambda_.1} parent=5 // pred_region
        %s286 = ssub.s32 %s15, 1
        // Predicated region
        $region53: #{_lambda_.1} parent=51 // pred_check
          %p287 = pneg %p193
        $region54: #{_lambda_.1} parent=51 // pred_check_branch
          %289 = sbr.rel (%p287) target = $region56
        $region55: #{_lambda_.1} parent=51 // pred_region
          %290 = dma.done [#allocation4], 3072
        $region56: #{_lambda_.1} parent=51 // pred_fallthru
          _
        %p291 = scmp.lt.s32.totalorder %s20, 1
        %s292 = scalar_select %p291, %s20, 1
        %s293 = smul.addr %s292, 4
        %s294 = scalar_lea.vmem %s0, %s293
        %p295 = pneg %p41
        %p296 = pneg %p38
        %p297 = scmp.lt.s32.totalorder %s20, 1
        %s298 = scalar_select %p297, %s20, 1
        %s299 = smul.addr %s298, 8
        %s300 = scalar_lea.vmem %s1, %s299
        %p301 = pneg %p67
        %p302 = pneg %p64
        %p303 = pneg %p88
        %p304 = pneg %p85
        %p305 = pneg %p109
        %p306 = pneg %p106
        %p307 = pneg %p130
        %p308 = pneg %p127
        %p309 = pneg %p151
        %p310 = pneg %p148
        %p311 = pneg %p172
        %p312 = pneg %p169
        %p313 = pneg %p193
        %p314 = pneg %p190
        %p315 = pneg %p219
        %p316 = pneg %p216
        %p317 = scmp.lt.s32.totalorder %s20, 1
        %s318 = scalar_select %p317, %s20, 1
        %s319 = smul.addr %s318, 8
        %s320 = scalar_lea.vmem %s8, %s319
        %p321 = scmp.lt.s32.totalorder %s20, 1
        %s322 = scalar_select %p321, %s20, 1
        %s323 = smul.addr %s322, 4
        %s324 = scalar_lea.vmem %s0, %s323
        %p325 = scmp.lt.s32.totalorder %s20, 1
        %s326 = scalar_select %p325, %s20, 1
        %s327 = smul.addr %s326, 8
        %s328 = scalar_lea.vmem %s1, %s327
        %p329 = scmp.lt.s32.totalorder %s20, 1
        %s330 = scalar_select %p329, %s20, 1
        %s331 = smul.addr %s330, 8
        %s332 = scalar_lea.vmem %s8, %s331
        %v334 = vld [vmem:[%s324] sm:$0xf]
        %v335 = vld [vmem:[%s2] sm:$0xff]
        %v336 = vld [vmem:[%s2 + $0x8] sm:$0xf]
        %v337 = vld [vmem:[%s2 + $0xc] sm:$0xff]
        %v338 = vld [vmem:[%s2 + $0x14] sm:$0xf]
        %v339 = vld [vmem:[%s2 + $0x18] sm:$0xff]
        %v340 = vld [vmem:[%s2 + $0x20] sm:$0xf]
        %v341 = vld [vmem:[%s2 + $0x24] sm:$0xff]
        %v342 = vld [vmem:[%s2 + $0x2c] sm:$0xf]
        %v343 = vld [vmem:[%s3] sm:$0x7]
        %v345 = vlaneseq
        %v346 = vshrl.u32 %v345, 7
        %v347 = vsub.s32 0, %v346
        %v348 = vrot.slane %v343, %v347
        %v349 = vlaneseq
        %v350 = vshrl.u32 %v349, 7
        %v351 = vsub.s32 1, %v350
        %v352 = vrot.slane %v343, %v351
        %v353 = vlaneseq
        %v354 = vshrl.u32 %v353, 7
        %v355 = vsub.s32 2, %v354
        %v356 = vrot.slane %v343, %v355
        %v368 = vunpack.c.l.b16 %v335
        %v369 = vunpack.c.h.b16 %v335
        %v370 = vunpack.c.l.b16 %v336
        %v371 = vunpack.c.l.b16 %v337
        %v372 = vunpack.c.h.b16 %v337
        %v373 = vunpack.c.l.b16 %v338
        %v374 = vunpack.c.l.b16 %v339
        %v375 = vunpack.c.h.b16 %v339
        %v376 = vunpack.c.l.b16 %v340
        %v377 = vunpack.c.l.b16 %v341
        %v378 = vunpack.c.h.b16 %v341
        %v379 = vunpack.c.l.b16 %v342
        %v380 = vpack.c.b16 %v371, %v368
        %v381 = vpack.c.b16 %v372, %v369
        %v382 = vpack.c.b16 %v373, %v370
        %v383 = vpack.c.b16 %v377, %v374
        %v384 = vpack.c.b16 %v378, %v375
        %v385 = vpack.c.b16 %v379, %v376
        %vm392 = vcmask 261120
        %v394 = vsel %vm392, %v334, 0
        %396 = vmatprep.subr.bf16.mxu0 %v381
        %397 = vmatpush1.bf16.msra.mxu0 %v380
        %398 = vmatprep.subr.bf16.mxu0 %v384
        %399 = vmatpush1.bf16.msra.mxu0 %v383
        %400 = vmatprep.subr.bf16.mxu0 0
        %401 = vmatpush1.bf16.msra.mxu0 0
        %402 = vmatprep.subr.bf16.mxu0 0
        %403 = vmatpush1.bf16.msra.mxu0 0
        %404 = vmatprep.subr.bf16.mxu0 0
        %405 = vmatpush1.bf16.msra.mxu0 0
        %406 = vmatprep.subr.bf16.mxu0 0
        %407 = vmatpush1.bf16.msra.mxu0 0
        %408 = vmatprep.subr.bf16.mxu0 0
        %409 = vmatpush1.bf16.msra.mxu0 0
        %410 = vmatprep.subr.bf16.mxu0 0
        %411 = vmatpush1.bf16.msra.mxu0 0
        %412 = vmatprep.subr.bf16.mxu0 0
        %413 = vmatpush1.bf16.msra.mxu0 0
        %414 = vmatprep.subr.bf16.mxu0 0
        %415 = vmatpush1.bf16.msra.mxu0 0
        %416 = vmatprep.subr.bf16.mxu0 0
        %417 = vmatpush1.bf16.msra.mxu0 0
        %418 = vmatprep.subr.bf16.mxu0 0
        %419 = vmatpush1.bf16.msra.mxu0 0
        %420 = vmatprep.subr.bf16.mxu0 0
        %421 = vmatpush1.bf16.msra.mxu0 0
        %422 = vmatprep.subr.bf16.mxu0 0
        %423 = vmatpush1.bf16.msra.mxu0 0
        %424 = vmatprep.subr.bf16.mxu0 0
        %425 = vmatpush1.bf16.msra.mxu0 0
        %426 = vmatprep.subr.bf16.mxu0 0
        %427 = vmatpush1.bf16.msra.mxu0 0
        %428 = vmatprep.mubr.bf16.mxu0 0
        %429 = vmatmul.mubr.bf16.gmra.mrb[0].mxu0 %v394
        %v430 = vpop.f32.mrb[0].mxu0
        %v431 = vadd.f32 %v348, %v430
        %v432 = vpop.f32.mrb[0].mxu0
        %v433 = vadd.f32 %v352, %v432
        %v434 = vpop.f32.mrb[0].mxu0
        %v435 = vpop.f32.mrb[0].mxu0
        %436 = vdwg.mxu0
        %437 = vmatprep.subr.bf16.mxu0 0
        %438 = vmatpush1.bf16.msra.mxu0 %v382
        %439 = vmatprep.subr.bf16.mxu0 0
        %440 = vmatpush1.bf16.msra.mxu0 %v385
        %441 = vmatprep.subr.bf16.mxu0 0
        %442 = vmatpush1.bf16.msra.mxu0 0
        %443 = vmatprep.subr.bf16.mxu0 0
        %444 = vmatpush1.bf16.msra.mxu0 0
        %445 = vmatprep.subr.bf16.mxu0 0
        %446 = vmatpush1.bf16.msra.mxu0 0
        %447 = vmatprep.subr.bf16.mxu0 0
        %448 = vmatpush1.bf16.msra.mxu0 0
        %449 = vmatprep.subr.bf16.mxu0 0
        %450 = vmatpush1.bf16.msra.mxu0 0
        %451 = vmatprep.subr.bf16.mxu0 0
        %452 = vmatpush1.bf16.msra.mxu0 0
        %453 = vmatprep.subr.bf16.mxu0 0
        %454 = vmatpush1.bf16.msra.mxu0 0
        %455 = vmatprep.subr.bf16.mxu0 0
        %456 = vmatpush1.bf16.msra.mxu0 0
        %457 = vmatprep.subr.bf16.mxu0 0
        %458 = vmatpush1.bf16.msra.mxu0 0
        %459 = vmatprep.subr.bf16.mxu0 0
        %460 = vmatpush1.bf16.msra.mxu0 0
        %461 = vmatprep.subr.bf16.mxu0 0
        %462 = vmatpush1.bf16.msra.mxu0 0
        %463 = vmatprep.subr.bf16.mxu0 0
        %464 = vmatpush1.bf16.msra.mxu0 0
        %465 = vmatprep.subr.bf16.mxu0 0
        %466 = vmatpush1.bf16.msra.mxu0 0
        %467 = vmatprep.subr.bf16.mxu0 0
        %468 = vmatpush1.bf16.msra.mxu0 0
        %469 = vmatprep.mubr.bf16.mxu0 0
        %470 = vmatmul.mubr.bf16.gmra.mrb[0].mxu0 %v394
        %v471 = vpop.f32.mrb[0].mxu0
        %v472 = vadd.f32 %v356, %v471
        %v473 = vpop.f32.mrb[0].mxu0
        %v474 = vpop.f32.mrb[0].mxu0
        %v475 = vpop.f32.mrb[0].mxu0
        %476 = vdwg.mxu0
        %v477 = vmul.f32 %v431, 0.5
        %v478 = vmul.f32 %v433, 0.5
        %v479 = vmul.f32 %v472, 0.5
        %v480 = vmul.f32 %v431, 0.70710677
        %v481 = vmul.f32 %v433, 0.70710677
        %v482 = vmul.f32 %v472, 0.70710677
        %v483 = vand.u32 2147483647, %v480
        %v484 = vand.u32 2147483647, %v481
        %v485 = vand.u32 2147483647, %v482
        %v486 = vmul.f32 %v483, 0.3275911
        %v487 = vmul.f32 %v484, 0.3275911
        %v488 = vmul.f32 %v485, 0.3275911
        %v489 = vadd.f32 %v486, 1.0
        %v490 = vadd.f32 %v487, 1.0
        %v491 = vadd.f32 %v488, 1.0
        %v492 = vrcp.pop %v489
        %v493 = vmul.f32 1.0, %v492
        %v494 = vrcp.pop %v490
        %v495 = vmul.f32 1.0, %v494
        %v496 = vrcp.pop %v491
        %v497 = vmul.f32 1.0, %v496
        %v498 = vmul.f32 %v493, 1.0614054
        %v499 = vmul.f32 %v495, 1.0614054
        %v500 = vmul.f32 %v497, 1.0614054
        %v501 = vadd.f32 %v498, -1.4531521
        %v502 = vadd.f32 %v499, -1.4531521
        %v503 = vadd.f32 %v500, -1.4531521
        %v504 = vmul.f32 %v501, %v493
        %v505 = vmul.f32 %v502, %v495
        %v506 = vmul.f32 %v503, %v497
        %v507 = vadd.f32 %v504, 1.4214138
        %v508 = vadd.f32 %v505, 1.4214138
        %v509 = vadd.f32 %v506, 1.4214138
        %v510 = vmul.f32 %v507, %v493
        %v511 = vmul.f32 %v508, %v495
        %v512 = vmul.f32 %v509, %v497
        %v513 = vadd.f32 %v510, -0.28449672
        %v514 = vadd.f32 %v511, -0.28449672
        %v515 = vadd.f32 %v512, -0.28449672
        %v516 = vmul.f32 %v513, %v493
        %v517 = vmul.f32 %v514, %v495
        %v518 = vmul.f32 %v515, %v497
        %v519 = vadd.f32 %v516, 0.2548296
        %v520 = vadd.f32 %v517, 0.2548296
        %v521 = vadd.f32 %v518, 0.2548296
        %v522 = vmul.f32 %v519, %v493
        %v523 = vmul.f32 %v520, %v495
        %v524 = vmul.f32 %v521, %v497
        %v525 = vsub.f32 0.0, %v483
        %v526 = vsub.f32 0.0, %v484
        %v527 = vsub.f32 0.0, %v485
        %v528 = vmul.f32 %v525, %v483
        %v529 = vmul.f32 %v526, %v484
        %v530 = vmul.f32 %v527, %v485
        %v531 = vmul.f32 %v528, 1.442695
        %v532 = vpow.pop %v531
        %v533 = vmul.f32 %v529, 1.442695
        %v534 = vpow.pop %v533
        %v535 = vmul.f32 %v530, 1.442695
        %v536 = vpow.pop %v535
        %v537 = vmul.f32 %v522, %v532
        %v538 = vmul.f32 %v523, %v534
        %v539 = vmul.f32 %v524, %v536
        %v540 = vsub.f32 1.0, %v537
        %v541 = vsub.f32 1.0, %v538
        %v542 = vsub.f32 1.0, %v539
        %vm543 = vcmp.lt.f32.partialorder %v480, 0.0
        %vm544 = vcmp.lt.f32.partialorder %v481, 0.0
        %vm545 = vcmp.lt.f32.partialorder %v482, 0.0
        %v546 = vsub.f32 0.0, %v540
        %v547 = vsub.f32 0.0, %v541
        %v548 = vsub.f32 0.0, %v542
        %v549 = vsel %vm543, %v546, %v540
        %v550 = vsel %vm544, %v547, %v541
        %v551 = vsel %vm545, %v548, %v542
        %v552 = vadd.f32 %v549, 1.0
        %v553 = vadd.f32 %v550, 1.0
        %v554 = vadd.f32 %v551, 1.0
        %v555 = vmul.f32 %v477, %v552
        %v556 = vmul.f32 %v478, %v553
        %v557 = vmul.f32 %v479, %v554
        %v558 = vld [vmem:[%s4] sm:$0xff]
        %v559 = vld [vmem:[%s4 + $0x8] sm:$0xff]
        %v560 = vld [vmem:[%s4 + $0x10] sm:$0xff]
        %v561 = vld [vmem:[%s4 + $0x18] sm:$0xff]
        %v562 = vld [vmem:[%s4 + $0x20] sm:$0xff]
        %v563 = vld [vmem:[%s4 + $0x28] sm:$0xff]
        %v564 = vld [vmem:[%s4 + $0x30] sm:$0xff]
        %v565 = vld [vmem:[%s4 + $0x38] sm:$0xff]
        %v566 = vld [vmem:[%s4 + $0x40] sm:$0xff]
        %v567 = vld [vmem:[%s4 + $0x48] sm:$0xff]
        %v568 = vld [vmem:[%s4 + $0x50] sm:$0xff]
        %v569 = vld [vmem:[%s4 + $0x58] sm:$0xff]
        %v570 = vld [vmem:[%s4 + $0x60] sm:$0xff]
        %v571 = vld [vmem:[%s4 + $0x68] sm:$0xff]
        %v572 = vld [vmem:[%s4 + $0x70] sm:$0xff]
        %v573 = vld [vmem:[%s4 + $0x78] sm:$0xff]
        %v574 = vld [vmem:[%s4 + $0x80] sm:$0xff]
        %v575 = vld [vmem:[%s4 + $0x88] sm:$0xff]
        %v576 = vld [vmem:[%s4 + $0x90] sm:$0xff]
        %v577 = vld [vmem:[%s4 + $0x98] sm:$0xff]
        %v578 = vld [vmem:[%s4 + $0xa0] sm:$0xff]
        %v579 = vld [vmem:[%s4 + $0xa8] sm:$0xff]
        %v580 = vld [vmem:[%s4 + $0xb0] sm:$0xff]
        %v581 = vld [vmem:[%s4 + $0xb8] sm:$0xff]
        %v582 = vld [vmem:[%s4 + $0xc0] sm:$0xff]
        %v583 = vld [vmem:[%s4 + $0xc8] sm:$0xff]
        %v584 = vld [vmem:[%s4 + $0xd0] sm:$0xff]
        %v585 = vld [vmem:[%s4 + $0xd8] sm:$0xff]
        %v586 = vld [vmem:[%s4 + $0xe0] sm:$0xff]
        %v587 = vld [vmem:[%s4 + $0xe8] sm:$0xff]
        %v588 = vld [vmem:[%s4 + $0xf0] sm:$0xff]
        %v589 = vld [vmem:[%s4 + $0xf8] sm:$0xff]
        %v590 = vld [vmem:[%s4 + $0x100] sm:$0xff]
        %v591 = vld [vmem:[%s4 + $0x108] sm:$0xff]
        %v592 = vld [vmem:[%s4 + $0x110] sm:$0xff]
        %v593 = vld [vmem:[%s4 + $0x118] sm:$0xff]
        %v594 = vld [vmem:[%s4 + $0x120] sm:$0xff]
        %v595 = vld [vmem:[%s4 + $0x128] sm:$0xff]
        %v596 = vld [vmem:[%s4 + $0x130] sm:$0xff]
        %v597 = vld [vmem:[%s4 + $0x138] sm:$0xff]
        %v598 = vld [vmem:[%s4 + $0x140] sm:$0xff]
        %v599 = vld [vmem:[%s4 + $0x148] sm:$0xff]
        %v600 = vld [vmem:[%s4 + $0x150] sm:$0xff]
        %v601 = vld [vmem:[%s4 + $0x158] sm:$0xff]
        %v602 = vld [vmem:[%s4 + $0x160] sm:$0xff]
        %v603 = vld [vmem:[%s4 + $0x168] sm:$0xff]
        %v604 = vld [vmem:[%s4 + $0x170] sm:$0xff]
        %v605 = vld [vmem:[%s4 + $0x178] sm:$0xff]
        %606 = vmatprep.subr.mxu0 0.0
        %607 = vmatpush1.msra.mxu0 %v558
        %608 = vmatprep.subr.mxu0 0.0
        %609 = vmatpush1.msra.mxu0 %v559
        %610 = vmatprep.subr.mxu0 0.0
        %611 = vmatpush1.msra.mxu0 %v560
        %612 = vmatprep.subr.mxu0 0.0
        %613 = vmatpush1.msra.mxu0 %v561
        %614 = vmatprep.subr.mxu0 0.0
        %615 = vmatpush1.msra.mxu0 %v562
        %616 = vmatprep.subr.mxu0 0.0
        %617 = vmatpush1.msra.mxu0 %v563
        %618 = vmatprep.subr.mxu0 0.0
        %619 = vmatpush1.msra.mxu0 %v564
        %620 = vmatprep.subr.mxu0 0.0
        %621 = vmatpush1.msra.mxu0 %v565
        %622 = vmatprep.subr.mxu0 0.0
        %623 = vmatpush1.msra.mxu0 %v566
        %624 = vmatprep.subr.mxu0 0.0
        %625 = vmatpush1.msra.mxu0 %v567
        %626 = vmatprep.subr.mxu0 0.0
        %627 = vmatpush1.msra.mxu0 %v568
        %628 = vmatprep.subr.mxu0 0.0
        %629 = vmatpush1.msra.mxu0 %v569
        %630 = vmatprep.subr.mxu0 0.0
        %631 = vmatpush1.msra.mxu0 %v570
        %632 = vmatprep.subr.mxu0 0.0
        %633 = vmatpush1.msra.mxu0 %v571
        %634 = vmatprep.subr.mxu0 0.0
        %635 = vmatpush1.msra.mxu0 %v572
        %636 = vmatprep.subr.mxu0 0.0
        %637 = vmatpush1.msra.mxu0 %v573
        %638 = vmatprep.subr.mxu0 0.0
        %639 = vmatpush1.msra.mxu0 %v574
        %640 = vmatprep.subr.mxu0 0.0
        %641 = vmatpush1.msra.mxu0 %v575
        %642 = vmatprep.subr.mxu0 0.0
        %643 = vmatpush1.msra.mxu0 %v576
        %644 = vmatprep.subr.mxu0 0.0
        %645 = vmatpush1.msra.mxu0 %v577
        %646 = vmatprep.subr.mxu0 0.0
        %647 = vmatpush1.msra.mxu0 %v578
        %648 = vmatprep.subr.mxu0 0.0
        %649 = vmatpush1.msra.mxu0 %v579
        %650 = vmatprep.subr.mxu0 0.0
        %651 = vmatpush1.msra.mxu0 %v580
        %652 = vmatprep.subr.mxu0 0.0
        %653 = vmatpush1.msra.mxu0 %v581
        %654 = vmatprep.subr.mxu0 0.0
        %655 = vmatpush1.msra.mxu0 %v582
        %656 = vmatprep.subr.mxu0 0.0
        %657 = vmatpush1.msra.mxu0 %v583
        %658 = vmatprep.subr.mxu0 0.0
        %659 = vmatpush1.msra.mxu0 %v584
        %660 = vmatprep.subr.mxu0 0.0
        %661 = vmatpush1.msra.mxu0 %v585
        %662 = vmatprep.subr.mxu0 0.0
        %663 = vmatpush1.msra.mxu0 %v586
        %664 = vmatprep.subr.mxu0 0.0
        %665 = vmatpush1.msra.mxu0 %v587
        %666 = vmatprep.subr.mxu0 0.0
        %667 = vmatpush1.msra.mxu0 %v588
        %668 = vmatprep.subr.mxu0 0.0
        %669 = vmatpush1.msra.mxu0 %v589
        %670 = vmatprep.mubr.f32.mxu0 %v556
        %671 = vmatmul.mubr.f32.gmra.mrb[0].mxu0 %v555
        %v672 = vpop.f32.mrb[0].mxu0
        %v673 = vadd.f32 0.0, %v672
        %v674 = vpop.f32.mrb[0].mxu0
        %675 = vdwg.mxu0
        %676 = vmatprep.subr.mxu0 0.0
        %677 = vmatpush1.msra.mxu0 %v590
        %678 = vmatprep.subr.mxu0 0.0
        %679 = vmatpush1.msra.mxu0 %v591
        %680 = vmatprep.subr.mxu0 0.0
        %681 = vmatpush1.msra.mxu0 %v592
        %682 = vmatprep.subr.mxu0 0.0
        %683 = vmatpush1.msra.mxu0 %v593
        %684 = vmatprep.subr.mxu0 0.0
        %685 = vmatpush1.msra.mxu0 %v594
        %686 = vmatprep.subr.mxu0 0.0
        %687 = vmatpush1.msra.mxu0 %v595
        %688 = vmatprep.subr.mxu0 0.0
        %689 = vmatpush1.msra.mxu0 %v596
        %690 = vmatprep.subr.mxu0 0.0
        %691 = vmatpush1.msra.mxu0 %v597
        %692 = vmatprep.subr.mxu0 0.0
        %693 = vmatpush1.msra.mxu0 %v598
        %694 = vmatprep.subr.mxu0 0.0
        %695 = vmatpush1.msra.mxu0 %v599
        %696 = vmatprep.subr.mxu0 0.0
        %697 = vmatpush1.msra.mxu0 %v600
        %698 = vmatprep.subr.mxu0 0.0
        %699 = vmatpush1.msra.mxu0 %v601
        %700 = vmatprep.subr.mxu0 0.0
        %701 = vmatpush1.msra.mxu0 %v602
        %702 = vmatprep.subr.mxu0 0.0
        %703 = vmatpush1.msra.mxu0 %v603
        %704 = vmatprep.subr.mxu0 0.0
        %705 = vmatpush1.msra.mxu0 %v604
        %706 = vmatprep.subr.mxu0 0.0
        %707 = vmatpush1.msra.mxu0 %v605
        %708 = vmatprep.subr.mxu0 0.0
        %709 = vmatpush1.msra.mxu0 0.0
        %710 = vmatprep.subr.mxu0 0.0
        %711 = vmatpush1.msra.mxu0 0.0
        %712 = vmatprep.subr.mxu0 0.0
        %713 = vmatpush1.msra.mxu0 0.0
        %714 = vmatprep.subr.mxu0 0.0
        %715 = vmatpush1.msra.mxu0 0.0
        %716 = vmatprep.subr.mxu0 0.0
        %717 = vmatpush1.msra.mxu0 0.0
        %718 = vmatprep.subr.mxu0 0.0
        %719 = vmatpush1.msra.mxu0 0.0
        %720 = vmatprep.subr.mxu0 0.0
        %721 = vmatpush1.msra.mxu0 0.0
        %722 = vmatprep.subr.mxu0 0.0
        %723 = vmatpush1.msra.mxu0 0.0
        %724 = vmatprep.subr.mxu0 0.0
        %725 = vmatpush1.msra.mxu0 0.0
        %726 = vmatprep.subr.mxu0 0.0
        %727 = vmatpush1.msra.mxu0 0.0
        %728 = vmatprep.subr.mxu0 0.0
        %729 = vmatpush1.msra.mxu0 0.0
        %730 = vmatprep.subr.mxu0 0.0
        %731 = vmatpush1.msra.mxu0 0.0
        %732 = vmatprep.subr.mxu0 0.0
        %733 = vmatpush1.msra.mxu0 0.0
        %734 = vmatprep.subr.mxu0 0.0
        %735 = vmatpush1.msra.mxu0 0.0
        %736 = vmatprep.subr.mxu0 0.0
        %737 = vmatpush1.msra.mxu0 0.0
        %738 = vmatprep.subr.mxu0 0.0
        %739 = vmatpush1.msra.mxu0 0.0
        %740 = vmatprep.mubr.f32.mxu0 0.0
        %741 = vmatmul.mubr.f32.gmra.mrb[0].mxu0 %v557
        %v742 = vpop.f32.mrb[0].mxu0
        %v743 = vadd.f32 %v673, %v742
        %v744 = vpop.f32.mrb[0].mxu0
        %745 = vdwg.mxu0
        %v746 = vmul.f32 %v555, %v555
        %v747 = vmul.f32 %v556, %v556
        %v748 = vmul.f32 %v557, %v557
        %749 = vmatprep.subr.mxu0 0.0
        %750 = vmatpush1.msra.mxu0 %v558
        %751 = vmatprep.subr.mxu0 0.0
        %752 = vmatpush1.msra.mxu0 %v559
        %753 = vmatprep.subr.mxu0 0.0
        %754 = vmatpush1.msra.mxu0 %v560
        %755 = vmatprep.subr.mxu0 0.0
        %756 = vmatpush1.msra.mxu0 %v561
        %757 = vmatprep.subr.mxu0 0.0
        %758 = vmatpush1.msra.mxu0 %v562
        %759 = vmatprep.subr.mxu0 0.0
        %760 = vmatpush1.msra.mxu0 %v563
        %761 = vmatprep.subr.mxu0 0.0
        %762 = vmatpush1.msra.mxu0 %v564
        %763 = vmatprep.subr.mxu0 0.0
        %764 = vmatpush1.msra.mxu0 %v565
        %765 = vmatprep.subr.mxu0 0.0
        %766 = vmatpush1.msra.mxu0 %v566
        %767 = vmatprep.subr.mxu0 0.0
        %768 = vmatpush1.msra.mxu0 %v567
        %769 = vmatprep.subr.mxu0 0.0
        %770 = vmatpush1.msra.mxu0 %v568
        %771 = vmatprep.subr.mxu0 0.0
        %772 = vmatpush1.msra.mxu0 %v569
        %773 = vmatprep.subr.mxu0 0.0
        %774 = vmatpush1.msra.mxu0 %v570
        %775 = vmatprep.subr.mxu0 0.0
        %776 = vmatpush1.msra.mxu0 %v571
        %777 = vmatprep.subr.mxu0 0.0
        %778 = vmatpush1.msra.mxu0 %v572
        %779 = vmatprep.subr.mxu0 0.0
        %780 = vmatpush1.msra.mxu0 %v573
        %781 = vmatprep.subr.mxu0 0.0
        %782 = vmatpush1.msra.mxu0 %v574
        %783 = vmatprep.subr.mxu0 0.0
        %784 = vmatpush1.msra.mxu0 %v575
        %785 = vmatprep.subr.mxu0 0.0
        %786 = vmatpush1.msra.mxu0 %v576
        %787 = vmatprep.subr.mxu0 0.0
        %788 = vmatpush1.msra.mxu0 %v577
        %789 = vmatprep.subr.mxu0 0.0
        %790 = vmatpush1.msra.mxu0 %v578
        %791 = vmatprep.subr.mxu0 0.0
        %792 = vmatpush1.msra.mxu0 %v579
        %793 = vmatprep.subr.mxu0 0.0
        %794 = vmatpush1.msra.mxu0 %v580
        %795 = vmatprep.subr.mxu0 0.0
        %796 = vmatpush1.msra.mxu0 %v581
        %797 = vmatprep.subr.mxu0 0.0
        %798 = vmatpush1.msra.mxu0 %v582
        %799 = vmatprep.subr.mxu0 0.0
        %800 = vmatpush1.msra.mxu0 %v583
        %801 = vmatprep.subr.mxu0 0.0
        %802 = vmatpush1.msra.mxu0 %v584
        %803 = vmatprep.subr.mxu0 0.0
        %804 = vmatpush1.msra.mxu0 %v585
        %805 = vmatprep.subr.mxu0 0.0
        %806 = vmatpush1.msra.mxu0 %v586
        %807 = vmatprep.subr.mxu0 0.0
        %808 = vmatpush1.msra.mxu0 %v587
        %809 = vmatprep.subr.mxu0 0.0
        %810 = vmatpush1.msra.mxu0 %v588
        %811 = vmatprep.subr.mxu0 0.0
        %812 = vmatpush1.msra.mxu0 %v589
        %813 = vmatprep.mubr.f32.mxu0 %v747
        %814 = vmatmul.mubr.f32.gmra.mrb[0].mxu0 %v746
        %v815 = vpop.f32.mrb[0].mxu0
        %v816 = vadd.f32 0.0, %v815
        %v817 = vpop.f32.mrb[0].mxu0
        %818 = vdwg.mxu0
        %819 = vmatprep.subr.mxu0 0.0
        %820 = vmatpush1.msra.mxu0 %v590
        %821 = vmatprep.subr.mxu0 0.0
        %822 = vmatpush1.msra.mxu0 %v591
        %823 = vmatprep.subr.mxu0 0.0
        %824 = vmatpush1.msra.mxu0 %v592
        %825 = vmatprep.subr.mxu0 0.0
        %826 = vmatpush1.msra.mxu0 %v593
        %827 = vmatprep.subr.mxu0 0.0
        %828 = vmatpush1.msra.mxu0 %v594
        %829 = vmatprep.subr.mxu0 0.0
        %830 = vmatpush1.msra.mxu0 %v595
        %831 = vmatprep.subr.mxu0 0.0
        %832 = vmatpush1.msra.mxu0 %v596
        %833 = vmatprep.subr.mxu0 0.0
        %834 = vmatpush1.msra.mxu0 %v597
        %835 = vmatprep.subr.mxu0 0.0
        %836 = vmatpush1.msra.mxu0 %v598
        %837 = vmatprep.subr.mxu0 0.0
        %838 = vmatpush1.msra.mxu0 %v599
        %839 = vmatprep.subr.mxu0 0.0
        %840 = vmatpush1.msra.mxu0 %v600
        %841 = vmatprep.subr.mxu0 0.0
        %842 = vmatpush1.msra.mxu0 %v601
        %843 = vmatprep.subr.mxu0 0.0
        %844 = vmatpush1.msra.mxu0 %v602
        %845 = vmatprep.subr.mxu0 0.0
        %846 = vmatpush1.msra.mxu0 %v603
        %847 = vmatprep.subr.mxu0 0.0
        %848 = vmatpush1.msra.mxu0 %v604
        %849 = vmatprep.subr.mxu0 0.0
        %850 = vmatpush1.msra.mxu0 %v605
        %851 = vmatprep.subr.mxu0 0.0
        %852 = vmatpush1.msra.mxu0 0.0
        %853 = vmatprep.subr.mxu0 0.0
        %854 = vmatpush1.msra.mxu0 0.0
        %855 = vmatprep.subr.mxu0 0.0
        %856 = vmatpush1.msra.mxu0 0.0
        %857 = vmatprep.subr.mxu0 0.0
        %858 = vmatpush1.msra.mxu0 0.0
        %859 = vmatprep.subr.mxu0 0.0
        %860 = vmatpush1.msra.mxu0 0.0
        %861 = vmatprep.subr.mxu0 0.0
        %862 = vmatpush1.msra.mxu0 0.0
        %863 = vmatprep.subr.mxu0 0.0
        %864 = vmatpush1.msra.mxu0 0.0
        %865 = vmatprep.subr.mxu0 0.0
        %866 = vmatpush1.msra.mxu0 0.0
        %867 = vmatprep.subr.mxu0 0.0
        %868 = vmatpush1.msra.mxu0 0.0
        %869 = vmatprep.subr.mxu0 0.0
        %870 = vmatpush1.msra.mxu0 0.0
        %871 = vmatprep.subr.mxu0 0.0
        %872 = vmatpush1.msra.mxu0 0.0
        %873 = vmatprep.subr.mxu0 0.0
        %874 = vmatpush1.msra.mxu0 0.0
        %875 = vmatprep.subr.mxu0 0.0
        %876 = vmatpush1.msra.mxu0 0.0
        %877 = vmatprep.subr.mxu0 0.0
        %878 = vmatpush1.msra.mxu0 0.0
        %879 = vmatprep.subr.mxu0 0.0
        %880 = vmatpush1.msra.mxu0 0.0
        %881 = vmatprep.subr.mxu0 0.0
        %882 = vmatpush1.msra.mxu0 0.0
        %883 = vmatprep.mubr.f32.mxu0 0.0
        %884 = vmatmul.mubr.f32.gmra.mrb[0].mxu0 %v748
        %v885 = vpop.f32.mrb[0].mxu0
        %v886 = vadd.f32 %v816, %v885
        %v887 = vpop.f32.mrb[0].mxu0
        %888 = vdwg.mxu0
        %v889 = vmul.f32 %v743, %v743
        %v890 = vsub.f32 %v886, %v889
        %v891 = vmax.f32 %v890, 0.0
        %v892 = vld [vmem:[%s328] sm:$0xff]
        %v893 = vadd.f32 %v891, 1e-05
        %v894 = vrsqrt.pop %v893
        %v895 = vmul.f32 %v892, %v894
        %v896 = vld [vmem:[%s5] sm:$0xff]
        %v897 = vld [vmem:[%s5 + $0x8] sm:$0xff]
        %v898 = vld [vmem:[%s5 + $0x10] sm:$0xff]
        %vm899 = vcmask 64512
        %v901 = vsel %vm899, %v895, 0
        %903 = vmatprep.subr.mxu0 %v897
        %904 = vmatpush1.msra.mxu0 %v896
        %905 = vmatprep.subr.mxu0 0.0
        %906 = vmatpush1.msra.mxu0 0.0
        %907 = vmatprep.subr.mxu0 0.0
        %908 = vmatpush1.msra.mxu0 0.0
        %909 = vmatprep.subr.mxu0 0.0
        %910 = vmatpush1.msra.mxu0 0.0
        %911 = vmatprep.subr.mxu0 0.0
        %912 = vmatpush1.msra.mxu0 0.0
        %913 = vmatprep.subr.mxu0 0.0
        %914 = vmatpush1.msra.mxu0 0.0
        %915 = vmatprep.subr.mxu0 0.0
        %916 = vmatpush1.msra.mxu0 0.0
        %917 = vmatprep.subr.mxu0 0.0
        %918 = vmatpush1.msra.mxu0 0.0
        %919 = vmatprep.subr.mxu0 0.0
        %920 = vmatpush1.msra.mxu0 0.0
        %921 = vmatprep.subr.mxu0 0.0
        %922 = vmatpush1.msra.mxu0 0.0
        %923 = vmatprep.subr.mxu0 0.0
        %924 = vmatpush1.msra.mxu0 0.0
        %925 = vmatprep.subr.mxu0 0.0
        %926 = vmatpush1.msra.mxu0 0.0
        %927 = vmatprep.subr.mxu0 0.0
        %928 = vmatpush1.msra.mxu0 0.0
        %929 = vmatprep.subr.mxu0 0.0
        %930 = vmatpush1.msra.mxu0 0.0
        %931 = vmatprep.subr.mxu0 0.0
        %932 = vmatpush1.msra.mxu0 0.0
        %933 = vmatprep.subr.mxu0 0.0
        %934 = vmatpush1.msra.mxu0 0.0
        %935 = vmatprep.subr.mxu0 0.0
        %936 = vmatpush1.msra.mxu0 0.0
        %937 = vmatprep.subr.mxu0 0.0
        %938 = vmatpush1.msra.mxu0 0.0
        %939 = vmatprep.subr.mxu0 0.0
        %940 = vmatpush1.msra.mxu0 0.0
        %941 = vmatprep.subr.mxu0 0.0
        %942 = vmatpush1.msra.mxu0 0.0
        %943 = vmatprep.subr.mxu0 0.0
        %944 = vmatpush1.msra.mxu0 0.0
        %945 = vmatprep.subr.mxu0 0.0
        %946 = vmatpush1.msra.mxu0 0.0
        %947 = vmatprep.subr.mxu0 0.0
        %948 = vmatpush1.msra.mxu0 0.0
        %949 = vmatprep.subr.mxu0 0.0
        %950 = vmatpush1.msra.mxu0 0.0
        %951 = vmatprep.subr.mxu0 0.0
        %952 = vmatpush1.msra.mxu0 0.0
        %953 = vmatprep.subr.mxu0 0.0
        %954 = vmatpush1.msra.mxu0 0.0
        %955 = vmatprep.subr.mxu0 0.0
        %956 = vmatpush1.msra.mxu0 0.0
        %957 = vmatprep.subr.mxu0 0.0
        %958 = vmatpush1.msra.mxu0 0.0
        %959 = vmatprep.subr.mxu0 0.0
        %960 = vmatpush1.msra.mxu0 0.0
        %961 = vmatprep.subr.mxu0 0.0
        %962 = vmatpush1.msra.mxu0 0.0
        %963 = vmatprep.subr.mxu0 0.0
        %964 = vmatpush1.msra.mxu0 0.0
        %965 = vmatprep.subr.mxu0 0.0
        %966 = vmatpush1.msra.mxu0 0.0
        %967 = vmatprep.mubr.f32.mxu0 0.0
        %968 = vmatmul.mubr.f32.gmra.mrb[0].mxu0 %v901
        %v969 = vpop.f32.mrb[0].mxu0
        %v970 = vadd.f32 0.0, %v969
        %v971 = vpop.f32.mrb[0].mxu0
        %v972 = vadd.f32 0.0, %v971
        %973 = vdwg.mxu0
        %974 = vmatprep.subr.mxu0 0.0
        %975 = vmatpush1.msra.mxu0 %v898
        %976 = vmatprep.subr.mxu0 0.0
        %977 = vmatpush1.msra.mxu0 0.0
        %978 = vmatprep.subr.mxu0 0.0
        %979 = vmatpush1.msra.mxu0 0.0
        %980 = vmatprep.subr.mxu0 0.0
        %981 = vmatpush1.msra.mxu0 0.0
        %982 = vmatprep.subr.mxu0 0.0
        %983 = vmatpush1.msra.mxu0 0.0
        %984 = vmatprep.subr.mxu0 0.0
        %985 = vmatpush1.msra.mxu0 0.0
        %986 = vmatprep.subr.mxu0 0.0
        %987 = vmatpush1.msra.mxu0 0.0
        %988 = vmatprep.subr.mxu0 0.0
        %989 = vmatpush1.msra.mxu0 0.0
        %990 = vmatprep.subr.mxu0 0.0
        %991 = vmatpush1.msra.mxu0 0.0
        %992 = vmatprep.subr.mxu0 0.0
        %993 = vmatpush1.msra.mxu0 0.0
        %994 = vmatprep.subr.mxu0 0.0
        %995 = vmatpush1.msra.mxu0 0.0
        %996 = vmatprep.subr.mxu0 0.0
        %997 = vmatpush1.msra.mxu0 0.0
        %998 = vmatprep.subr.mxu0 0.0
        %999 = vmatpush1.msra.mxu0 0.0
        %1000 = vmatprep.subr.mxu0 0.0
        %1001 = vmatpush1.msra.mxu0 0.0
        %1002 = vmatprep.subr.mxu0 0.0
        %1003 = vmatpush1.msra.mxu0 0.0
        %1004 = vmatprep.subr.mxu0 0.0
        %1005 = vmatpush1.msra.mxu0 0.0
        %1006 = vmatprep.subr.mxu0 0.0
        %1007 = vmatpush1.msra.mxu0 0.0
        %1008 = vmatprep.subr.mxu0 0.0
        %1009 = vmatpush1.msra.mxu0 0.0
        %1010 = vmatprep.subr.mxu0 0.0
        %1011 = vmatpush1.msra.mxu0 0.0
        %1012 = vmatprep.subr.mxu0 0.0
        %1013 = vmatpush1.msra.mxu0 0.0
        %1014 = vmatprep.subr.mxu0 0.0
        %1015 = vmatpush1.msra.mxu0 0.0
        %1016 = vmatprep.subr.mxu0 0.0
        %1017 = vmatpush1.msra.mxu0 0.0
        %1018 = vmatprep.subr.mxu0 0.0
        %1019 = vmatpush1.msra.mxu0 0.0
        %1020 = vmatprep.subr.mxu0 0.0
        %1021 = vmatpush1.msra.mxu0 0.0
        %1022 = vmatprep.subr.mxu0 0.0
        %1023 = vmatpush1.msra.mxu0 0.0
        %1024 = vmatprep.subr.mxu0 0.0
        %1025 = vmatpush1.msra.mxu0 0.0
        %1026 = vmatprep.subr.mxu0 0.0
        %1027 = vmatpush1.msra.mxu0 0.0
        %1028 = vmatprep.subr.mxu0 0.0
        %1029 = vmatpush1.msra.mxu0 0.0
        %1030 = vmatprep.subr.mxu0 0.0
        %1031 = vmatpush1.msra.mxu0 0.0
        %1032 = vmatprep.subr.mxu0 0.0
        %1033 = vmatpush1.msra.mxu0 0.0
        %1034 = vmatprep.subr.mxu0 0.0
        %1035 = vmatpush1.msra.mxu0 0.0
        %1036 = vmatprep.subr.mxu0 0.0
        %1037 = vmatpush1.msra.mxu0 0.0
        %1038 = vmatprep.mubr.f32.mxu0 0.0
        %1039 = vmatmul.mubr.f32.gmra.mrb[0].mxu0 %v901
        %v1040 = vpop.f32.mrb[0].mxu0
        %v1041 = vadd.f32 0.0, %v1040
        %v1042 = vpop.f32.mrb[0].mxu0
        %1043 = vdwg.mxu0
        %1044 = vst.msk [vmem:[#allocation2] sm:$0xff] %vm899, %v892
        %v1045 = vmul.f32 %v895, %v743
        %v1046 = vsub.f32 0.0, %v1045
        %1048 = vrot.lane.b32.xlu0 %v1046, 8
        %v1049 = vpop.permute.xlu0 %1048
        %vm1051 = vcmask 130112
        %1052 = vst.msk [vmem:[#allocation2] sm:$0xff] %vm1051, %v1049
        %v1053 = vld [vmem:[#allocation2] sm:$0xff]
        %v1054 = vld [vmem:[%s6] sm:$0xff]
        %v1055 = vld [vmem:[%s6 + $0x8] sm:$0xff]
        %v1056 = vld [vmem:[%s6 + $0x10] sm:$0xff]
        %v1057 = vld [vmem:[%s6 + $0x18] sm:$0xff]
        %v1058 = vld [vmem:[%s6 + $0x20] sm:$0xff]
        %v1059 = vld [vmem:[%s6 + $0x28] sm:$0xff]
        %v1060 = vld [vmem:[%s6 + $0x30] sm:$0xff]
        %v1061 = vld [vmem:[%s6 + $0x38] sm:$0xff]
        %vm1062 = vcmask 130048
        %v1064 = vsel %vm1062, %v1053, 0
        %1066 = vmatprep.subr.mxu0 %v1055
        %1067 = vmatpush1.msra.mxu0 %v1054
        %1068 = vmatprep.subr.mxu0 %v1059
        %1069 = vmatpush1.msra.mxu0 %v1058
        %1070 = vmatprep.subr.mxu0 0.0
        %1071 = vmatpush1.msra.mxu0 0.0
        %1072 = vmatprep.subr.mxu0 0.0
        %1073 = vmatpush1.msra.mxu0 0.0
        %1074 = vmatprep.subr.mxu0 0.0
        %1075 = vmatpush1.msra.mxu0 0.0
        %1076 = vmatprep.subr.mxu0 0.0
        %1077 = vmatpush1.msra.mxu0 0.0
        %1078 = vmatprep.subr.mxu0 0.0
        %1079 = vmatpush1.msra.mxu0 0.0
        %1080 = vmatprep.subr.mxu0 0.0
        %1081 = vmatpush1.msra.mxu0 0.0
        %1082 = vmatprep.subr.mxu0 0.0
        %1083 = vmatpush1.msra.mxu0 0.0
        %1084 = vmatprep.subr.mxu0 0.0
        %1085 = vmatpush1.msra.mxu0 0.0
        %1086 = vmatprep.subr.mxu0 0.0
        %1087 = vmatpush1.msra.mxu0 0.0
        %1088 = vmatprep.subr.mxu0 0.0
        %1089 = vmatpush1.msra.mxu0 0.0
        %1090 = vmatprep.subr.mxu0 0.0
        %1091 = vmatpush1.msra.mxu0 0.0
        %1092 = vmatprep.subr.mxu0 0.0
        %1093 = vmatpush1.msra.mxu0 0.0
        %1094 = vmatprep.subr.mxu0 0.0
        %1095 = vmatpush1.msra.mxu0 0.0
        %1096 = vmatprep.subr.mxu0 0.0
        %1097 = vmatpush1.msra.mxu0 0.0
        %1098 = vmatprep.subr.mxu0 0.0
        %1099 = vmatpush1.msra.mxu0 0.0
        %1100 = vmatprep.subr.mxu0 0.0
        %1101 = vmatpush1.msra.mxu0 0.0
        %1102 = vmatprep.subr.mxu0 0.0
        %1103 = vmatpush1.msra.mxu0 0.0
        %1104 = vmatprep.subr.mxu0 0.0
        %1105 = vmatpush1.msra.mxu0 0.0
        %1106 = vmatprep.subr.mxu0 0.0
        %1107 = vmatpush1.msra.mxu0 0.0
        %1108 = vmatprep.subr.mxu0 0.0
        %1109 = vmatpush1.msra.mxu0 0.0
        %1110 = vmatprep.subr.mxu0 0.0
        %1111 = vmatpush1.msra.mxu0 0.0
        %1112 = vmatprep.subr.mxu0 0.0
        %1113 = vmatpush1.msra.mxu0 0.0
        %1114 = vmatprep.subr.mxu0 0.0
        %1115 = vmatpush1.msra.mxu0 0.0
        %1116 = vmatprep.subr.mxu0 0.0
        %1117 = vmatpush1.msra.mxu0 0.0
        %1118 = vmatprep.subr.mxu0 0.0
        %1119 = vmatpush1.msra.mxu0 0.0
        %1120 = vmatprep.subr.mxu0 0.0
        %1121 = vmatpush1.msra.mxu0 0.0
        %1122 = vmatprep.subr.mxu0 0.0
        %1123 = vmatpush1.msra.mxu0 0.0
        %1124 = vmatprep.subr.mxu0 0.0
        %1125 = vmatpush1.msra.mxu0 0.0
        %1126 = vmatprep.subr.mxu0 0.0
        %1127 = vmatpush1.msra.mxu0 0.0
        %1128 = vmatprep.subr.mxu0 0.0
        %1129 = vmatpush1.msra.mxu0 0.0
        %1130 = vmatprep.mubr.f32.mxu0 0.0
        %1131 = vmatmul.mubr.f32.gmra.mrb[0].mxu0 %v1064
        %v1132 = vpop.f32.mrb[0].mxu0
        %v1133 = vadd.f32 0.0, %v1132
        %v1134 = vpop.f32.mrb[0].mxu0
        %v1135 = vadd.f32 0.0, %v1134
        %1136 = vdwg.mxu0
        %1137 = vmatprep.subr.mxu0 %v1057
        %1138 = vmatpush1.msra.mxu0 %v1056
        %1139 = vmatprep.subr.mxu0 %v1061
        %1140 = vmatpush1.msra.mxu0 %v1060
        %1141 = vmatprep.subr.mxu0 0.0
        %1142 = vmatpush1.msra.mxu0 0.0
        %1143 = vmatprep.subr.mxu0 0.0
        %1144 = vmatpush1.msra.mxu0 0.0
        %1145 = vmatprep.subr.mxu0 0.0
        %1146 = vmatpush1.msra.mxu0 0.0
        %1147 = vmatprep.subr.mxu0 0.0
        %1148 = vmatpush1.msra.mxu0 0.0
        %1149 = vmatprep.subr.mxu0 0.0
        %1150 = vmatpush1.msra.mxu0 0.0
        %1151 = vmatprep.subr.mxu0 0.0
        %1152 = vmatpush1.msra.mxu0 0.0
        %1153 = vmatprep.subr.mxu0 0.0
        %1154 = vmatpush1.msra.mxu0 0.0
        %1155 = vmatprep.subr.mxu0 0.0
        %1156 = vmatpush1.msra.mxu0 0.0
        %1157 = vmatprep.subr.mxu0 0.0
        %1158 = vmatpush1.msra.mxu0 0.0
        %1159 = vmatprep.subr.mxu0 0.0
        %1160 = vmatpush1.msra.mxu0 0.0
        %1161 = vmatprep.subr.mxu0 0.0
        %1162 = vmatpush1.msra.mxu0 0.0
        %1163 = vmatprep.subr.mxu0 0.0
        %1164 = vmatpush1.msra.mxu0 0.0
        %1165 = vmatprep.subr.mxu0 0.0
        %1166 = vmatpush1.msra.mxu0 0.0
        %1167 = vmatprep.subr.mxu0 0.0
        %1168 = vmatpush1.msra.mxu0 0.0
        %1169 = vmatprep.subr.mxu0 0.0
        %1170 = vmatpush1.msra.mxu0 0.0
        %1171 = vmatprep.subr.mxu0 0.0
        %1172 = vmatpush1.msra.mxu0 0.0
        %1173 = vmatprep.subr.mxu0 0.0
        %1174 = vmatpush1.msra.mxu0 0.0
        %1175 = vmatprep.subr.mxu0 0.0
        %1176 = vmatpush1.msra.mxu0 0.0
        %1177 = vmatprep.subr.mxu0 0.0
        %1178 = vmatpush1.msra.mxu0 0.0
        %1179 = vmatprep.subr.mxu0 0.0
        %1180 = vmatpush1.msra.mxu0 0.0
        %1181 = vmatprep.subr.mxu0 0.0
        %1182 = vmatpush1.msra.mxu0 0.0
        %1183 = vmatprep.subr.mxu0 0.0
        %1184 = vmatpush1.msra.mxu0 0.0
        %1185 = vmatprep.subr.mxu0 0.0
        %1186 = vmatpush1.msra.mxu0 0.0
        %1187 = vmatprep.subr.mxu0 0.0
        %1188 = vmatpush1.msra.mxu0 0.0
        %1189 = vmatprep.subr.mxu0 0.0
        %1190 = vmatpush1.msra.mxu0 0.0
        %1191 = vmatprep.subr.mxu0 0.0
        %1192 = vmatpush1.msra.mxu0 0.0
        %1193 = vmatprep.subr.mxu0 0.0
        %1194 = vmatpush1.msra.mxu0 0.0
        %1195 = vmatprep.subr.mxu0 0.0
        %1196 = vmatpush1.msra.mxu0 0.0
        %1197 = vmatprep.subr.mxu0 0.0
        %1198 = vmatpush1.msra.mxu0 0.0
        %1199 = vmatprep.subr.mxu0 0.0
        %1200 = vmatpush1.msra.mxu0 0.0
        %1201 = vmatprep.mubr.f32.mxu0 0.0
        %1202 = vmatmul.mubr.f32.gmra.mrb[0].mxu0 %v1064
        %v1203 = vpop.f32.mrb[0].mxu0
        %v1204 = vadd.f32 0.0, %v1203
        %v1205 = vpop.f32.mrb[0].mxu0
        %v1206 = vadd.f32 0.0, %v1205
        %1207 = vdwg.mxu0
        %v1208 = vmul.f32 %v555, %v970
        %v1209 = vmul.f32 %v556, %v972
        %v1210 = vmul.f32 %v557, %v1041
        %v1211 = vadd.f32 %v1208, %v1133
        %v1212 = vadd.f32 %v1209, %v1135
        %v1213 = vadd.f32 %v1210, %v1204
        %v1214 = vpack.c.bf16 %v1211, %v1211
        %v1215 = vpack.c.bf16 %v1212, %v1212
        %v1216 = vpack.c.bf16 %v1213, %v1213
        %v1217 = vld [vmem:[#allocation3] sm:$0xf]
        %v1218 = vld [vmem:[#allocation3 + $0x4] sm:$0xf]
        %v1219 = vld [vmem:[#allocation3 + $0x8] sm:$0xf]
        %v1220 = vld [vmem:[#allocation3 + $0xc] sm:$0xf]
        %v1221 = vld [vmem:[#allocation3 + $0x10] sm:$0xf]
        %v1222 = vld [vmem:[#allocation3 + $0x14] sm:$0xf]
        %v1223 = vld [vmem:[#allocation3 + $0x18] sm:$0xf]
        %v1224 = vld [vmem:[#allocation3 + $0x1c] sm:$0xf]
        %v1225 = vld [vmem:[#allocation3 + $0x20] sm:$0xf]
        %v1226 = vld [vmem:[#allocation3 + $0x24] sm:$0xf]
        %v1227 = vld [vmem:[#allocation3 + $0x28] sm:$0xf]
        %v1228 = vld [vmem:[#allocation3 + $0x2c] sm:$0xf]
        %v1229 = vld [vmem:[#allocation3 + $0x30] sm:$0xf]
        %v1230 = vld [vmem:[#allocation3 + $0x34] sm:$0xf]
        %v1231 = vld [vmem:[#allocation3 + $0x38] sm:$0xf]
        %v1232 = vld [vmem:[#allocation3 + $0x3c] sm:$0xf]
        %v1233 = vld [vmem:[#allocation3 + $0x40] sm:$0xf]
        %v1234 = vld [vmem:[#allocation3 + $0x44] sm:$0xf]
        %v1235 = vld [vmem:[#allocation3 + $0x48] sm:$0xf]
        %v1236 = vld [vmem:[#allocation3 + $0x4c] sm:$0xf]
        %v1237 = vld [vmem:[#allocation3 + $0x50] sm:$0xf]
        %v1238 = vld [vmem:[#allocation3 + $0x54] sm:$0xf]
        %v1239 = vld [vmem:[#allocation3 + $0x58] sm:$0xf]
        %v1240 = vld [vmem:[#allocation3 + $0x5c] sm:$0xf]
        %v1241 = vld [vmem:[#allocation3 + $0x60] sm:$0xf]
        %v1242 = vld [vmem:[#allocation3 + $0x64] sm:$0xf]
        %v1243 = vld [vmem:[#allocation3 + $0x68] sm:$0xf]
        %v1244 = vld [vmem:[#allocation3 + $0x6c] sm:$0xf]
        %v1245 = vld [vmem:[#allocation3 + $0x70] sm:$0xf]
        %v1246 = vld [vmem:[#allocation3 + $0x74] sm:$0xf]
        %v1247 = vld [vmem:[#allocation3 + $0x78] sm:$0xf]
        %v1248 = vld [vmem:[#allocation3 + $0x7c] sm:$0xf]
        %v1249 = vld [vmem:[#allocation3 + $0x80] sm:$0xf]
        %v1250 = vld [vmem:[#allocation3 + $0x84] sm:$0xf]
        %v1251 = vld [vmem:[#allocation3 + $0x88] sm:$0xf]
        %v1252 = vld [vmem:[#allocation3 + $0x8c] sm:$0xf]
        %v1253 = vld [vmem:[#allocation3 + $0x90] sm:$0xf]
        %v1254 = vld [vmem:[#allocation3 + $0x94] sm:$0xf]
        %v1255 = vld [vmem:[#allocation3 + $0x98] sm:$0xf]
        %v1256 = vld [vmem:[#allocation3 + $0x9c] sm:$0xf]
        %v1257 = vld [vmem:[#allocation3 + $0xa0] sm:$0xf]
        %v1258 = vld [vmem:[#allocation3 + $0xa4] sm:$0xf]
        %v1259 = vld [vmem:[#allocation3 + $0xa8] sm:$0xf]
        %v1260 = vld [vmem:[#allocation3 + $0xac] sm:$0xf]
        %v1261 = vld [vmem:[#allocation3 + $0xb0] sm:$0xf]
        %v1262 = vld [vmem:[#allocation3 + $0xb4] sm:$0xf]
        %v1263 = vld [vmem:[#allocation3 + $0xb8] sm:$0xf]
        %v1264 = vld [vmem:[#allocation3 + $0xbc] sm:$0xf]
        %v1313 = vunpack.c.l.b16 %v1217
        %v1314 = vunpack.c.l.b16 %v1218
        %v1315 = vunpack.c.l.b16 %v1219
        %v1316 = vunpack.c.l.b16 %v1220
        %v1317 = vunpack.c.l.b16 %v1221
        %v1318 = vunpack.c.l.b16 %v1222
        %v1319 = vunpack.c.l.b16 %v1223
        %v1320 = vunpack.c.l.b16 %v1224
        %v1321 = vunpack.c.l.b16 %v1225
        %v1322 = vunpack.c.l.b16 %v1226
        %v1323 = vunpack.c.l.b16 %v1227
        %v1324 = vunpack.c.l.b16 %v1228
        %v1325 = vunpack.c.l.b16 %v1229
        %v1326 = vunpack.c.l.b16 %v1230
        %v1327 = vunpack.c.l.b16 %v1231
        %v1328 = vunpack.c.l.b16 %v1232
        %v1329 = vunpack.c.l.b16 %v1233
        %v1330 = vunpack.c.l.b16 %v1234
        %v1331 = vunpack.c.l.b16 %v1235
        %v1332 = vunpack.c.l.b16 %v1236
        %v1333 = vunpack.c.l.b16 %v1237
        %v1334 = vunpack.c.l.b16 %v1238
        %v1335 = vunpack.c.l.b16 %v1239
        %v1336 = vunpack.c.l.b16 %v1240
        %v1337 = vunpack.c.l.b16 %v1241
        %v1338 = vunpack.c.l.b16 %v1242
        %v1339 = vunpack.c.l.b16 %v1243
        %v1340 = vunpack.c.l.b16 %v1244
        %v1341 = vunpack.c.l.b16 %v1245
        %v1342 = vunpack.c.l.b16 %v1246
        %v1343 = vunpack.c.l.b16 %v1247
        %v1344 = vunpack.c.l.b16 %v1248
        %v1345 = vunpack.c.l.b16 %v1249
        %v1346 = vunpack.c.l.b16 %v1250
        %v1347 = vunpack.c.l.b16 %v1251
        %v1348 = vunpack.c.l.b16 %v1252
        %v1349 = vunpack.c.l.b16 %v1253
        %v1350 = vunpack.c.l.b16 %v1254
        %v1351 = vunpack.c.l.b16 %v1255
        %v1352 = vunpack.c.l.b16 %v1256
        %v1353 = vunpack.c.l.b16 %v1257
        %v1354 = vunpack.c.l.b16 %v1258
        %v1355 = vunpack.c.l.b16 %v1259
        %v1356 = vunpack.c.l.b16 %v1260
        %v1357 = vunpack.c.l.b16 %v1261
        %v1358 = vunpack.c.l.b16 %v1262
        %v1359 = vunpack.c.l.b16 %v1263
        %v1360 = vunpack.c.l.b16 %v1264
        %v1361 = vpack.c.b16 %v1314, %v1313
        %v1362 = vpack.c.b16 %v1316, %v1315
        %v1363 = vpack.c.b16 %v1318, %v1317
        %v1364 = vpack.c.b16 %v1320, %v1319
        %v1365 = vpack.c.b16 %v1322, %v1321
        %v1366 = vpack.c.b16 %v1324, %v1323
        %v1367 = vpack.c.b16 %v1326, %v1325
        %v1368 = vpack.c.b16 %v1328, %v1327
        %v1369 = vpack.c.b16 %v1330, %v1329
        %v1370 = vpack.c.b16 %v1332, %v1331
        %v1371 = vpack.c.b16 %v1334, %v1333
        %v1372 = vpack.c.b16 %v1336, %v1335
        %v1373 = vpack.c.b16 %v1338, %v1337
        %v1374 = vpack.c.b16 %v1340, %v1339
        %v1375 = vpack.c.b16 %v1342, %v1341
        %v1376 = vpack.c.b16 %v1344, %v1343
        %v1377 = vpack.c.b16 %v1346, %v1345
        %v1378 = vpack.c.b16 %v1348, %v1347
        %v1379 = vpack.c.b16 %v1350, %v1349
        %v1380 = vpack.c.b16 %v1352, %v1351
        %v1381 = vpack.c.b16 %v1354, %v1353
        %v1382 = vpack.c.b16 %v1356, %v1355
        %v1383 = vpack.c.b16 %v1358, %v1357
        %v1384 = vpack.c.b16 %v1360, %v1359
        %1409 = vmatprep.subr.bf16.mxu0 0
        %1410 = vmatpush1.bf16.msra.mxu0 %v1361
        %1411 = vmatprep.subr.bf16.mxu0 0
        %1412 = vmatpush1.bf16.msra.mxu0 %v1362
        %1413 = vmatprep.subr.bf16.mxu0 0
        %1414 = vmatpush1.bf16.msra.mxu0 %v1363
        %1415 = vmatprep.subr.bf16.mxu0 0
        %1416 = vmatpush1.bf16.msra.mxu0 %v1364
        %1417 = vmatprep.subr.bf16.mxu0 0
        %1418 = vmatpush1.bf16.msra.mxu0 %v1365
        %1419 = vmatprep.subr.bf16.mxu0 0
        %1420 = vmatpush1.bf16.msra.mxu0 %v1366
        %1421 = vmatprep.subr.bf16.mxu0 0
        %1422 = vmatpush1.bf16.msra.mxu0 %v1367
        %1423 = vmatprep.subr.bf16.mxu0 0
        %1424 = vmatpush1.bf16.msra.mxu0 %v1368
        %1425 = vmatprep.subr.bf16.mxu0 0
        %1426 = vmatpush1.bf16.msra.mxu0 %v1369
        %1427 = vmatprep.subr.bf16.mxu0 0
        %1428 = vmatpush1.bf16.msra.mxu0 %v1370
        %1429 = vmatprep.subr.bf16.mxu0 0
        %1430 = vmatpush1.bf16.msra.mxu0 %v1371
        %1431 = vmatprep.subr.bf16.mxu0 0
        %1432 = vmatpush1.bf16.msra.mxu0 %v1372
        %1433 = vmatprep.subr.bf16.mxu0 0
        %1434 = vmatpush1.bf16.msra.mxu0 %v1373
        %1435 = vmatprep.subr.bf16.mxu0 0
        %1436 = vmatpush1.bf16.msra.mxu0 %v1374
        %1437 = vmatprep.subr.bf16.mxu0 0
        %1438 = vmatpush1.bf16.msra.mxu0 %v1375
        %1439 = vmatprep.subr.bf16.mxu0 0
        %1440 = vmatpush1.bf16.msra.mxu0 %v1376
        %1441 = vmatprep.mubr.bf16.mxu0 %v1215
        %1442 = vmatmul.mubr.bf16.gmra.mrb[0].mxu0 %v1214
        %v1443 = vpop.f32.mrb[0].mxu0
        %v1444 = vadd.f32 %v1206, %v1443
        %v1445 = vpop.f32.mrb[0].mxu0
        %v1446 = vpop.f32.mrb[0].mxu0
        %v1447 = vpop.f32.mrb[0].mxu0
        %1448 = vdwg.mxu0
        %1449 = vmatprep.subr.bf16.mxu0 0
        %1450 = vmatpush1.bf16.msra.mxu0 %v1377
        %1451 = vmatprep.subr.bf16.mxu0 0
        %1452 = vmatpush1.bf16.msra.mxu0 %v1378
        %1453 = vmatprep.subr.bf16.mxu0 0
        %1454 = vmatpush1.bf16.msra.mxu0 %v1379
        %1455 = vmatprep.subr.bf16.mxu0 0
        %1456 = vmatpush1.bf16.msra.mxu0 %v1380
        %1457 = vmatprep.subr.bf16.mxu0 0
        %1458 = vmatpush1.bf16.msra.mxu0 %v1381
        %1459 = vmatprep.subr.bf16.mxu0 0
        %1460 = vmatpush1.bf16.msra.mxu0 %v1382
        %1461 = vmatprep.subr.bf16.mxu0 0
        %1462 = vmatpush1.bf16.msra.mxu0 %v1383
        %1463 = vmatprep.subr.bf16.mxu0 0
        %1464 = vmatpush1.bf16.msra.mxu0 %v1384
        %1465 = vmatprep.subr.bf16.mxu0 0
        %1466 = vmatpush1.bf16.msra.mxu0 0
        %1467 = vmatprep.subr.bf16.mxu0 0
        %1468 = vmatpush1.bf16.msra.mxu0 0
        %1469 = vmatprep.subr.bf16.mxu0 0
        %1470 = vmatpush1.bf16.msra.mxu0 0
        %1471 = vmatprep.subr.bf16.mxu0 0
        %1472 = vmatpush1.bf16.msra.mxu0 0
        %1473 = vmatprep.subr.bf16.mxu0 0
        %1474 = vmatpush1.bf16.msra.mxu0 0
        %1475 = vmatprep.subr.bf16.mxu0 0
        %1476 = vmatpush1.bf16.msra.mxu0 0
        %1477 = vmatprep.subr.bf16.mxu0 0
        %1478 = vmatpush1.bf16.msra.mxu0 0
        %1479 = vmatprep.subr.bf16.mxu0 0
        %1480 = vmatpush1.bf16.msra.mxu0 0
        %1481 = vmatprep.mubr.bf16.mxu0 0
        %1482 = vmatmul.mubr.bf16.gmra.mrb[0].mxu0 %v1216
        %v1483 = vpop.f32.mrb[0].mxu0
        %v1484 = vadd.f32 %v1444, %v1483
        %v1485 = vpop.f32.mrb[0].mxu0
        %v1486 = vpop.f32.mrb[0].mxu0
        %v1487 = vpop.f32.mrb[0].mxu0
        %1488 = vdwg.mxu0
        %1489 = vst [vmem:[%s332] sm:$0xff] %v1484
        %p1490 = scmp.lt.s32.totalorder %s20, 1
        %s1491 = scalar_select %p1490, %s20, 1
        %s1492 = smul.addr %s1491, 8
        %s1493 = scalar_lea.vmem %s8, %s1492
        // Predicated region
        $region57: #{_lambda_.1} parent=51 // pred_check
          %p1494 = pneg %p216
        $region58: #{_lambda_.1} parent=51 // pred_check_branch
          %1496 = sbr.rel (%p1494) target = $region60
        $region59: #{_lambda_.1} parent=51 // pred_region
          _
        $region60: #{_lambda_.1} parent=51 // pred_fallthru
          _
      $region52: #{_lambda_.1} parent=5 // pred_fallthru
        _
      %p1497 = scmp.le.s32.totalorder 2, %s15
      // Predicated region
      $region61: #{_lambda_.1} parent=5 // pred_check
        %p1498 = pneg %p1497
      $region62: #{_lambda_.1} parent=5 // pred_check_branch
        %1500 = sbr.rel (%p1498) target = $region64
      $region63: #{_lambda_.1} parent=5 // pred_region
        %s1501 = ssub.s32 %s15, 2
        // Predicated region
        $region65: #{_lambda_.1} parent=63 // pred_check
          %p1502 = pneg %p222
        $region66: #{_lambda_.1} parent=63 // pred_check_branch
          %1504 = sbr.rel (%p1502) target = $region68
        $region67: #{_lambda_.1} parent=63 // pred_region
          %p1505 = scmp.lt.s32.totalorder %s21, 1
          %s1506 = scalar_select %p1505, %s21, 1
          %s1507 = smul.addr %s1506, 8
          %s1508 = scalar_lea.vmem %s8, %s1507
        $region68: #{_lambda_.1} parent=63 // pred_fallthru
          _
      $region64: #{_lambda_.1} parent=5 // pred_fallthru
        _
    $region6: #{_lambda_.1} parent=1 // loop_footer
      %s19 = sadd.s32 1, %s15
    $region7: #{_lambda_.1} parent=1 // loop_footer_branch
      %14 = sbr.rel target = $region3
    $region8: #{_lambda_.1} parent=1 // loop_exit
      _
    %1509 = vsyncpa [#allocation4], 1
    %s1510 = scalar_lea.sflag [#allocation4], 1
    %1511 = vsyncpa %s1510, 1

</llo_original>
